<compile_context>
chip_gen: v7x
topology: tpu7x:2x2x1
jax: 0.10.0
libtpu: 0.0.40
codegen_flags: <defaults>
</compile_context>

<pallas_src>
import functools
import math

import jax
import jax.numpy as jnp
from jax.experimental import pallas as pl
from jax.experimental.pallas import tpu as pltpu


def _round_up(x, m):
    return (x + m - 1) // m * m


def _weighted_triplet_kernel(xr_ref, xct_ref, labr_ref, labc_ref, out_ref,
                             m_p, s_p, w_p, m_n, s_n, w_n, *, n_valid):
    j = pl.program_id(1)
    nj = pl.num_programs(1)

    @pl.when(j == 0)
    def _init():
        neg_fill = jnp.full(m_p.shape, -1e30, jnp.float32)
        zero_fill = jnp.zeros(s_p.shape, jnp.float32)
        m_p[...] = neg_fill
        m_n[...] = neg_fill
        s_p[...] = zero_fill
        w_p[...] = zero_fill
        s_n[...] = zero_fill
        w_n[...] = zero_fill

    # ---- distance tile: dist[m, n] = sqrt(max(|xr_m|^2 + |xc_n|^2 - 2 <xr_m, xc_n>, 1e-12))
    xr = xr_ref[...]                  # (TM, D)  native dtype -> MXU
    xct = xct_ref[...]                # (D, TN)  native dtype -> MXU
    gram = jnp.dot(xr, xct, preferred_element_type=jnp.float32)     # (TM, TN)

    xr_f = xr.astype(jnp.float32)
    xct_f = xct.astype(jnp.float32)
    xx_r = jnp.sum(xr_f * xr_f, axis=1, keepdims=True)              # (TM, 1)
    xx_c = jnp.sum(xct_f * xct_f, axis=0, keepdims=True)            # (1, TN)

    d2 = jnp.maximum(xx_r + xx_c - 2.0 * gram, 1e-12)
    dist = jnp.sqrt(d2)                                             # (TM, TN)

    # ---- masks (bool, fused into selects; padded columns masked out) ----
    lab_r = labr_ref[...]                                           # (TM, 1) int32
    lab_c = labc_ref[...]                                           # (1, TN) int32
    tn = labc_ref.shape[1]
    col_ids = jax.lax.broadcasted_iota(jnp.int32, (1, tn), 1) + j * tn
    col_valid = col_ids < n_valid                                   # (1, TN)
    same = lab_r == lab_c                                           # (TM, TN)
    pos_mask = same & col_valid
    neg_mask = (~same) & col_valid

    neg_big = jnp.float32(-1e30)

    # ---- positives: online softmax with weights exp(+dist) ----
    m_p_old = m_p[...]
    m_p_new = jnp.maximum(
        m_p_old,
        jnp.max(jnp.where(pos_mask, dist, neg_big), axis=1, keepdims=True))
    a_p = jnp.exp(m_p_old - m_p_new)
    e_p = jnp.where(pos_mask, jnp.exp(dist - m_p_new), 0.0)
    s_p[...] = a_p * s_p[...] + jnp.sum(e_p, axis=1, keepdims=True)
    w_p[...] = a_p * w_p[...] + jnp.sum(e_p * dist, axis=1, keepdims=True)
    m_p[...] = m_p_new

    # ---- negatives: online softmax with weights exp(-dist) ----
    m_n_old = m_n[...]
    m_n_new = jnp.maximum(
        m_n_old,
        jnp.max(jnp.where(neg_mask, -dist, neg_big), axis=1, keepdims=True))
    a_n = jnp.exp(m_n_old - m_n_new)
    e_n = jnp.where(neg_mask, jnp.exp(-dist - m_n_new), 0.0)
    s_n[...] = a_n * s_n[...] + jnp.sum(e_n, axis=1, keepdims=True)
    w_n[...] = a_n * w_n[...] + jnp.sum(e_n * dist, axis=1, keepdims=True)
    m_n[...] = m_n_new

    # ---- finalize: wp / wn and stable SoftMarginLoss term per row ----
    @pl.when(j == nj - 1)
    def _finalize():
        eps = 1e-12
        # reference: wp = sum(exp(d)*d) / (sum(exp(d)) + eps); with the running
        # max shift the "+eps" becomes "+eps*exp(-m)" (mathematically identical).
        wp = w_p[...] / (s_p[...] + eps * jnp.exp(-m_p[...]))
        wn = w_n[...] / (s_n[...] + eps * jnp.exp(-m_n[...]))
        # SoftMarginLoss(wn - wp, y=1) term = log(1 + exp(-(wn - wp))) (stable softplus)
        z = wp - wn
        out_ref[...] = jnp.maximum(z, 0.0) + jnp.log(1.0 + jnp.exp(-jnp.abs(z)))


def weighted_triplet_loss(inputs, targets, normalize_feature=False, *, tm=256, tn=512):
    """inputs: [N, D] float features, targets: [N] int labels. Returns scalar loss."""
    n, d = inputs.shape
    eps = 1e-12

    x = inputs
    if normalize_feature:
        xf = x.astype(jnp.float32)
        norm = jnp.sqrt(jnp.sum(xf * xf, axis=-1, keepdims=True))
        x = (xf / (norm + eps)).astype(inputs.dtype)
    labels = targets.astype(jnp.int32)

    # ---- tile sizes / padding (TM multiple of 8, TN multiple of 128 or full width) ----
    n8 = _round_up(n, 8)
    if n8 <= tn:
        tm_eff = _round_up(min(max(tm, 8), n8), 8)
        n_pad = _round_up(n8, tm_eff)
        tn_eff = n_pad                      # single column block == full (padded) width
    else:
        tm_eff = _round_up(min(max(tm, 8), n8), 8)
        tn_eff = _round_up(min(max(tn, 128), n8), 128)
        n_pad = _round_up(n, math.lcm(tm_eff, tn_eff))

    pad = n_pad - n
    x_p = jnp.pad(x, ((0, pad), (0, 0)))
    x_t = x_p.T                                           # (D, N_pad) - second orientation
    lab_p = jnp.pad(labels, (0, pad), constant_values=-1)
    lab_row = lab_p.reshape(n_pad, 1)
    lab_col = lab_p.reshape(1, n_pad)

    grid = (n_pad // tm_eff, n_pad // tn_eff)
    kernel = functools.partial(_weighted_triplet_kernel, n_valid=n)

    per_row = pl.pallas_call(
        kernel,
        out_shape=jax.ShapeDtypeStruct((n_pad, 1), jnp.float32),
        grid_spec=pltpu.PrefetchScalarGridSpec(
            num_scalar_prefetch=0,
            grid=grid,
            in_specs=[
                pl.BlockSpec((tm_eff, d), lambda i, j: (i, 0)),   # x row tile
                pl.BlockSpec((d, tn_eff), lambda i, j: (0, j)),   # x col tile (transposed)
                pl.BlockSpec((tm_eff, 1), lambda i, j: (i, 0)),   # row labels
                pl.BlockSpec((1, tn_eff), lambda i, j: (0, j)),   # col labels
            ],
            out_specs=pl.BlockSpec((tm_eff, 1), lambda i, j: (i, 0)),
            scratch_shapes=[pltpu.VMEM((tm_eff, 1), jnp.float32)] * 6,
        ),
        compiler_params=pltpu.CompilerParams(
            dimension_semantics=("parallel", "arbitrary"),
            vmem_limit_bytes=48 * 1024 * 1024,
        ),
    )(x_p, x_t, lab_row, lab_col)

    return jnp.mean(per_row[:n, 0])


def _reference_loss(inputs, targets, normalize_feature=False):
    """Pure-JAX reference mirroring the PyTorch module (margin=None path)."""
    eps = 1e-12
    x = inputs.astype(jnp.float32)
    if normalize_feature:
        x = x / (jnp.linalg.norm(x, axis=-1, keepdims=True) + eps)
    xx = jnp.sum(x * x, axis=1, keepdims=True)
    dist = jnp.sqrt(jnp.clip(xx + xx.T - 2.0 * (x @ x.T), 1e-12, None))
    is_pos = (targets[:, None] == targets[None, :]).astype(jnp.float32)
    is_neg = 1.0 - is_pos
    exp_ap = jnp.exp(dist) * is_pos
    exp_an = jnp.exp(-dist) * is_neg
    final_wp = jnp.sum(exp_ap * dist, axis=1) / (jnp.sum(exp_ap, axis=1) + eps)
    final_wn = jnp.sum(exp_an * dist, axis=1) / (jnp.sum(exp_an, axis=1) + eps)
    return jnp.mean(jnp.log(1.0 + jnp.exp(-(final_wn - final_wp))))


if __name__ == "__main__":
    key = jax.random.PRNGKey(0)
    k1, k2 = jax.random.split(key)

    # Main case: 32 identities x 8 samples; tm=64 / tn=128 gives a (4, 2) grid so
    # the online (flash-style) accumulation across column blocks is exercised.
    N, D = 256, 32
    feats = jax.random.normal(k1, (N, D), dtype=jnp.float32)
    labels = jnp.arange(N, dtype=jnp.int32) // 8

    out = jax.block_until_ready(
        weighted_triplet_loss(feats, labels, normalize_feature=False, tm=64, tn=128))
    ref = jax.block_until_ready(_reference_loss(feats, labels, False))
    assert jnp.allclose(out, ref, rtol=1e-4, atol=1e-4), (out, ref)

    out_n = jax.block_until_ready(
        weighted_triplet_loss(feats, labels, normalize_feature=True, tm=64, tn=128))
    ref_n = jax.block_until_ready(_reference_loss(feats, labels, True))
    assert jnp.allclose(out_n, ref_n, rtol=1e-4, atol=1e-4), (out_n, ref_n)

    # Small, non-multiple-of-8 case: exercises padding + column-validity masking.
    N2, D2 = 10, 16
    feats2 = jax.random.normal(k2, (N2, D2), dtype=jnp.float32)
    labels2 = jnp.array([0, 0, 1, 1, 2, 2, 3, 3, 4, 4], dtype=jnp.int32)
    out2 = jax.block_until_ready(weighted_triplet_loss(feats2, labels2))
    ref2 = jax.block_until_ready(_reference_loss(feats2, labels2, False))
    assert jnp.allclose(out2, ref2, rtol=1e-4, atol=1e-4), (out2, ref2)

    print("KERNEL_OK")
</pallas_src>

<mosaic_0001>
module attributes {stable_mosaic.version = 11 : i64} {
  func.func @_weighted_triplet_kernel(%arg0: i32, %arg1: i32, %arg2: memref<64x32xf32, #tpu.memory_space<vmem>>, %arg3: memref<32x128xf32, #tpu.memory_space<vmem>>, %arg4: memref<64x1xi32, #tpu.memory_space<vmem>>, %arg5: memref<1x128xi32, #tpu.memory_space<vmem>>, %arg6: memref<64x1xf32, #tpu.memory_space<vmem>>, %arg7: memref<64x1xf32, #tpu.memory_space<vmem>>, %arg8: memref<64x1xf32, #tpu.memory_space<vmem>>, %arg9: memref<64x1xf32, #tpu.memory_space<vmem>>, %arg10: memref<64x1xf32, #tpu.memory_space<vmem>>, %arg11: memref<64x1xf32, #tpu.memory_space<vmem>>, %arg12: memref<64x1xf32, #tpu.memory_space<vmem>>) attributes {dimension_semantics = [#tpu.dimension_semantics<parallel>, #tpu.dimension_semantics<arbitrary>], iteration_bounds = array<i64: 4, 2>, scalar_prefetch = 0 : i64, scratch_operands = 6 : i64, tpu.core_type = #tpu.core_type<tc>, window_params = [{transform_indices = @transform_0, window_bounds = array<i64: 64, 32>}, {transform_indices = @transform_1, window_bounds = array<i64: 32, 128>}, {transform_indices = @transform_2, window_bounds = array<i64: 64, 1>}, {transform_indices = @transform_3, window_bounds = array<i64: 1, 128>}, {transform_indices = @transform_4, window_bounds = array<i64: 64, 1>}]} {
    %c0_i32 = arith.constant 0 : i32
    %0 = arith.cmpi eq, %arg1, %c0_i32 : i32
    %1 = arith.extui %0 : i1 to i32
    %c0_i32_0 = arith.constant 0 : i32
    %2 = arith.cmpi ne, %1, %c0_i32_0 : i32
    scf.if %2 {
      %cst_50 = arith.constant -1.000000e+30 : f32
      %98 = vector.broadcast %cst_50 : f32 to vector<64x1xf32>
      %cst_51 = arith.constant 0.000000e+00 : f32
      %99 = vector.broadcast %cst_51 : f32 to vector<64x1xf32>
      %c0_52 = arith.constant 0 : index
      %c0_53 = arith.constant 0 : index
      %100 = vector.load %arg7[%c0_52, %c0_53] : memref<64x1xf32, #tpu.memory_space<vmem>>, vector<64x1xf32>
      tpu.vector_store %arg7[%c0_52, %c0_53], %98 {strides = array<i32>} : memref<64x1xf32, #tpu.memory_space<vmem>>, vector<64x1xf32>,
      %c0_54 = arith.constant 0 : index
      %c0_55 = arith.constant 0 : index
      %101 = vector.load %arg10[%c0_54, %c0_55] : memref<64x1xf32, #tpu.memory_space<vmem>>, vector<64x1xf32>
      tpu.vector_store %arg10[%c0_54, %c0_55], %98 {strides = array<i32>} : memref<64x1xf32, #tpu.memory_space<vmem>>, vector<64x1xf32>,
      %c0_56 = arith.constant 0 : index
      %c0_57 = arith.constant 0 : index
      %102 = vector.load %arg8[%c0_56, %c0_57] : memref<64x1xf32, #tpu.memory_space<vmem>>, vector<64x1xf32>
      tpu.vector_store %arg8[%c0_56, %c0_57], %99 {strides = array<i32>} : memref<64x1xf32, #tpu.memory_space<vmem>>, vector<64x1xf32>,
      %c0_58 = arith.constant 0 : index
      %c0_59 = arith.constant 0 : index
      %103 = vector.load %arg9[%c0_58, %c0_59] : memref<64x1xf32, #tpu.memory_space<vmem>>, vector<64x1xf32>
      tpu.vector_store %arg9[%c0_58, %c0_59], %99 {strides = array<i32>} : memref<64x1xf32, #tpu.memory_space<vmem>>, vector<64x1xf32>,
      %c0_60 = arith.constant 0 : index
      %c0_61 = arith.constant 0 : index
      %104 = vector.load %arg11[%c0_60, %c0_61] : memref<64x1xf32, #tpu.memory_space<vmem>>, vector<64x1xf32>
      tpu.vector_store %arg11[%c0_60, %c0_61], %99 {strides = array<i32>} : memref<64x1xf32, #tpu.memory_space<vmem>>, vector<64x1xf32>,
      %c0_62 = arith.constant 0 : index
      %c0_63 = arith.constant 0 : index
      %105 = vector.load %arg12[%c0_62, %c0_63] : memref<64x1xf32, #tpu.memory_space<vmem>>, vector<64x1xf32>
      tpu.vector_store %arg12[%c0_62, %c0_63], %99 {strides = array<i32>} : memref<64x1xf32, #tpu.memory_space<vmem>>, vector<64x1xf32>,
    } else {
    }
    %c0 = arith.constant 0 : index
    %c0_1 = arith.constant 0 : index
    %3 = vector.load %arg2[%c0, %c0_1] : memref<64x32xf32, #tpu.memory_space<vmem>>, vector<64x32xf32>
    %c0_2 = arith.constant 0 : index
    %c0_3 = arith.constant 0 : index
    %4 = vector.load %arg3[%c0_2, %c0_3] : memref<32x128xf32, #tpu.memory_space<vmem>>, vector<32x128xf32>
    %cst = arith.constant dense<0.000000e+00> : vector<64x128xf32>
    %5 = tpu.matmul %3, %4, %cst {dimension_numbers = #tpu.dot_dimension_numbers<[1], [0], [0], [1], [0, 0, 1, 1], [], []>} : vector<64x32xf32>, vector<32x128xf32>, vector<64x128xf32> -> vector<64x128xf32>
    %6 = arith.mulf %3, %3 : vector<64x32xf32>
    %cst_4 = arith.constant dense<0.000000e+00> : vector<64xf32>
    %7 = vector.multi_reduction <add>, %6, %cst_4 [1] : vector<64x32xf32> to vector<64xf32>
    %8 = vector.shape_cast %7 : vector<64xf32> to vector<64x1xf32>
    %9 = arith.mulf %4, %4 : vector<32x128xf32>
    %cst_5 = arith.constant dense<0.000000e+00> : vector<128xf32>
    %10 = vector.multi_reduction <add>, %9, %cst_5 [0] : vector<32x128xf32> to vector<128xf32>
    %11 = vector.shape_cast %10 : vector<128xf32> to vector<1x128xf32>
    %12 = vector.broadcast %8 : vector<64x1xf32> to vector<64x128xf32>
    %13 = vector.broadcast %11 : vector<1x128xf32> to vector<64x128xf32>
    %14 = arith.addf %12, %13 : vector<64x128xf32>
    %cst_6 = arith.constant 2.000000e+00 : f32
    %15 = vector.broadcast %cst_6 : f32 to vector<64x128xf32>
    %16 = arith.mulf %15, %5 : vector<64x128xf32>
    %17 = arith.subf %14, %16 : vector<64x128xf32>
    %cst_7 = arith.constant 9.99999996E-13 : f32
    %18 = vector.broadcast %cst_7 : f32 to vector<64x128xf32>
    %19 = arith.maximumf %17, %18 : vector<64x128xf32>
    %20 = math.sqrt %19 : vector<64x128xf32>
    %c0_8 = arith.constant 0 : index
    %c0_9 = arith.constant 0 : index
    %21 = vector.load %arg4[%c0_8, %c0_9] : memref<64x1xi32, #tpu.memory_space<vmem>>, vector<64x1xi32>
    %c0_10 = arith.constant 0 : index
    %c0_11 = arith.constant 0 : index
    %22 = vector.load %arg5[%c0_10, %c0_11] : memref<1x128xi32, #tpu.memory_space<vmem>>, vector<1x128xi32>
    %23 = tpu.iota {dimensions = array<i32: 1>} : vector<1x128xi32>
    %c128_i32 = arith.constant 128 : i32
    %24 = arith.muli %arg1, %c128_i32 : i32
    %25 = vector.broadcast %24 : i32 to vector<1x128xi32>
    %26 = arith.addi %23, %25 : vector<1x128xi32>
    %c256_i32 = arith.constant 256 : i32
    %27 = vector.broadcast %c256_i32 : i32 to vector<1x128xi32>
    %28 = arith.cmpi slt, %26, %27 : vector<1x128xi32>
    %29 = vector.broadcast %21 : vector<64x1xi32> to vector<64x128xi32>
    %30 = vector.broadcast %22 : vector<1x128xi32> to vector<64x128xi32>
    %31 = arith.cmpi eq, %29, %30 : vector<64x128xi32>
    %32 = vector.broadcast %28 : vector<1x128xi1> to vector<64x128xi1>
    %33 = arith.andi %31, %32 : vector<64x128xi1>
    %cst_12 = arith.constant dense<true> : vector<64x128xi1>
    %34 = arith.xori %31, %cst_12 : vector<64x128xi1>
    %35 = vector.broadcast %28 : vector<1x128xi1> to vector<64x128xi1>
    %36 = arith.andi %34, %35 : vector<64x128xi1>
    %c0_13 = arith.constant 0 : index
    %c0_14 = arith.constant 0 : index
    %37 = vector.load %arg7[%c0_13, %c0_14] : memref<64x1xf32, #tpu.memory_space<vmem>>, vector<64x1xf32>
    %cst_15 = arith.constant -1.000000e+30 : f32
    %38 = vector.broadcast %cst_15 : f32 to vector<64x128xf32>
    %39 = arith.select %33, %20, %38 : vector<64x128xi1>, vector<64x128xf32>
    %cst_16 = arith.constant dense<0xFF800000> : vector<64xf32>
    %40 = vector.multi_reduction <maximumf>, %39, %cst_16 [1] : vector<64x128xf32> to vector<64xf32>
    %41 = vector.shape_cast %40 : vector<64xf32> to vector<64x1xf32>
    %42 = arith.maximumf %37, %41 : vector<64x1xf32>
    %43 = arith.subf %37, %42 : vector<64x1xf32>
    %44 = math.exp %43 : vector<64x1xf32>
    %45 = vector.broadcast %42 : vector<64x1xf32> to vector<64x128xf32>
    %46 = arith.subf %20, %45 : vector<64x128xf32>
    %47 = math.exp %46 : vector<64x128xf32>
    %cst_17 = arith.constant 0.000000e+00 : f32
    %48 = vector.broadcast %cst_17 : f32 to vector<64x128xf32>
    %49 = arith.select %33, %47, %48 : vector<64x128xi1>, vector<64x128xf32>
    %c0_18 = arith.constant 0 : index
    %c0_19 = arith.constant 0 : index
    %50 = vector.load %arg8[%c0_18, %c0_19] : memref<64x1xf32, #tpu.memory_space<vmem>>, vector<64x1xf32>
    %51 = arith.mulf %44, %50 : vector<64x1xf32>
    %cst_20 = arith.constant dense<0.000000e+00> : vector<64xf32>
    %52 = vector.multi_reduction <add>, %49, %cst_20 [1] : vector<64x128xf32> to vector<64xf32>
    %53 = vector.shape_cast %52 : vector<64xf32> to vector<64x1xf32>
    %54 = arith.addf %51, %53 : vector<64x1xf32>
    %c0_21 = arith.constant 0 : index
    %c0_22 = arith.constant 0 : index
    %55 = vector.load %arg8[%c0_21, %c0_22] : memref<64x1xf32, #tpu.memory_space<vmem>>, vector<64x1xf32>
    tpu.vector_store %arg8[%c0_21, %c0_22], %54 {strides = array<i32>} : memref<64x1xf32, #tpu.memory_space<vmem>>, vector<64x1xf32>,
    %c0_23 = arith.constant 0 : index
    %c0_24 = arith.constant 0 : index
    %56 = vector.load %arg9[%c0_23, %c0_24] : memref<64x1xf32, #tpu.memory_space<vmem>>, vector<64x1xf32>
    %57 = arith.mulf %44, %56 : vector<64x1xf32>
    %58 = arith.mulf %49, %20 : vector<64x128xf32>
    %cst_25 = arith.constant dense<0.000000e+00> : vector<64xf32>
    %59 = vector.multi_reduction <add>, %58, %cst_25 [1] : vector<64x128xf32> to vector<64xf32>
    %60 = vector.shape_cast %59 : vector<64xf32> to vector<64x1xf32>
    %61 = arith.addf %57, %60 : vector<64x1xf32>
    %c0_26 = arith.constant 0 : index
    %c0_27 = arith.constant 0 : index
    %62 = vector.load %arg9[%c0_26, %c0_27] : memref<64x1xf32, #tpu.memory_space<vmem>>, vector<64x1xf32>
    tpu.vector_store %arg9[%c0_26, %c0_27], %61 {strides = array<i32>} : memref<64x1xf32, #tpu.memory_space<vmem>>, vector<64x1xf32>,
    %c0_28 = arith.constant 0 : index
    %c0_29 = arith.constant 0 : index
    %63 = vector.load %arg7[%c0_28, %c0_29] : memref<64x1xf32, #tpu.memory_space<vmem>>, vector<64x1xf32>
    tpu.vector_store %arg7[%c0_28, %c0_29], %42 {strides = array<i32>} : memref<64x1xf32, #tpu.memory_space<vmem>>, vector<64x1xf32>,
    %c0_30 = arith.constant 0 : index
    %c0_31 = arith.constant 0 : index
    %64 = vector.load %arg10[%c0_30, %c0_31] : memref<64x1xf32, #tpu.memory_space<vmem>>, vector<64x1xf32>
    %cst_32 = arith.constant 0.000000e+00 : f32
    %65 = vector.broadcast %cst_32 : f32 to vector<64x128xf32>
    %66 = arith.subf %65, %20 : vector<64x128xf32>
    %cst_33 = arith.constant -1.000000e+30 : f32
    %67 = vector.broadcast %cst_33 : f32 to vector<64x128xf32>
    %68 = arith.select %36, %66, %67 : vector<64x128xi1>, vector<64x128xf32>
    %cst_34 = arith.constant dense<0xFF800000> : vector<64xf32>
    %69 = vector.multi_reduction <maximumf>, %68, %cst_34 [1] : vector<64x128xf32> to vector<64xf32>
    %70 = vector.shape_cast %69 : vector<64xf32> to vector<64x1xf32>
    %71 = arith.maximumf %64, %70 : vector<64x1xf32>
    %72 = arith.subf %64, %71 : vector<64x1xf32>
    %73 = math.exp %72 : vector<64x1xf32>
    %cst_35 = arith.constant 0.000000e+00 : f32
    %74 = vector.broadcast %cst_35 : f32 to vector<64x128xf32>
    %75 = arith.subf %74, %20 : vector<64x128xf32>
    %76 = vector.broadcast %71 : vector<64x1xf32> to vector<64x128xf32>
    %77 = arith.subf %75, %76 : vector<64x128xf32>
    %78 = math.exp %77 : vector<64x128xf32>
    %cst_36 = arith.constant 0.000000e+00 : f32
    %79 = vector.broadcast %cst_36 : f32 to vector<64x128xf32>
    %80 = arith.select %36, %78, %79 : vector<64x128xi1>, vector<64x128xf32>
    %c0_37 = arith.constant 0 : index
    %c0_38 = arith.constant 0 : index
    %81 = vector.load %arg11[%c0_37, %c0_38] : memref<64x1xf32, #tpu.memory_space<vmem>>, vector<64x1xf32>
    %82 = arith.mulf %73, %81 : vector<64x1xf32>
    %cst_39 = arith.constant dense<0.000000e+00> : vector<64xf32>
    %83 = vector.multi_reduction <add>, %80, %cst_39 [1] : vector<64x128xf32> to vector<64xf32>
    %84 = vector.shape_cast %83 : vector<64xf32> to vector<64x1xf32>
    %85 = arith.addf %82, %84 : vector<64x1xf32>
    %c0_40 = arith.constant 0 : index
    %c0_41 = arith.constant 0 : index
    %86 = vector.load %arg11[%c0_40, %c0_41] : memref<64x1xf32, #tpu.memory_space<vmem>>, vector<64x1xf32>
    tpu.vector_store %arg11[%c0_40, %c0_41], %85 {strides = array<i32>} : memref<64x1xf32, #tpu.memory_space<vmem>>, vector<64x1xf32>,
    %c0_42 = arith.constant 0 : index
    %c0_43 = arith.constant 0 : index
    %87 = vector.load %arg12[%c0_42, %c0_43] : memref<64x1xf32, #tpu.memory_space<vmem>>, vector<64x1xf32>
    %88 = arith.mulf %73, %87 : vector<64x1xf32>
    %89 = arith.mulf %80, %20 : vector<64x128xf32>
    %cst_44 = arith.constant dense<0.000000e+00> : vector<64xf32>
    %90 = vector.multi_reduction <add>, %89, %cst_44 [1] : vector<64x128xf32> to vector<64xf32>
    %91 = vector.shape_cast %90 : vector<64xf32> to vector<64x1xf32>
    %92 = arith.addf %88, %91 : vector<64x1xf32>
    %c0_45 = arith.constant 0 : index
    %c0_46 = arith.constant 0 : index
    %93 = vector.load %arg12[%c0_45, %c0_46] : memref<64x1xf32, #tpu.memory_space<vmem>>, vector<64x1xf32>
    tpu.vector_store %arg12[%c0_45, %c0_46], %92 {strides = array<i32>} : memref<64x1xf32, #tpu.memory_space<vmem>>, vector<64x1xf32>,
    %c0_47 = arith.constant 0 : index
    %c0_48 = arith.constant 0 : index
    %94 = vector.load %arg10[%c0_47, %c0_48] : memref<64x1xf32, #tpu.memory_space<vmem>>, vector<64x1xf32>
    tpu.vector_store %arg10[%c0_47, %c0_48], %71 {strides = array<i32>} : memref<64x1xf32, #tpu.memory_space<vmem>>, vector<64x1xf32>,
    %c1_i32 = arith.constant 1 : i32
    %95 = arith.cmpi eq, %arg1, %c1_i32 : i32
    %96 = arith.extui %95 : i1 to i32
    %c0_i32_49 = arith.constant 0 : i32
    %97 = arith.cmpi ne, %96, %c0_i32_49 : i32
    scf.if %97 {
      %c0_50 = arith.constant 0 : index
      %c0_51 = arith.constant 0 : index
      %98 = vector.load %arg9[%c0_50, %c0_51] : memref<64x1xf32, #tpu.memory_space<vmem>>, vector<64x1xf32>
      %c0_52 = arith.constant 0 : index
      %c0_53 = arith.constant 0 : index
      %99 = vector.load %arg8[%c0_52, %c0_53] : memref<64x1xf32, #tpu.memory_space<vmem>>, vector<64x1xf32>
      %c0_54 = arith.constant 0 : index
      %c0_55 = arith.constant 0 : index
      %100 = vector.load %arg7[%c0_54, %c0_55] : memref<64x1xf32, #tpu.memory_space<vmem>>, vector<64x1xf32>
      %cst_56 = arith.constant 0.000000e+00 : f32
      %101 = vector.broadcast %cst_56 : f32 to vector<64x1xf32>
      %102 = arith.subf %101, %100 : vector<64x1xf32>
      %103 = math.exp %102 : vector<64x1xf32>
      %cst_57 = arith.constant 9.99999996E-13 : f32
      %104 = vector.broadcast %cst_57 : f32 to vector<64x1xf32>
      %105 = arith.mulf %104, %103 : vector<64x1xf32>
      %106 = arith.addf %99, %105 : vector<64x1xf32>
      %107 = arith.divf %98, %106 : vector<64x1xf32>
      %c0_58 = arith.constant 0 : index
      %c0_59 = arith.constant 0 : index
      %108 = vector.load %arg12[%c0_58, %c0_59] : memref<64x1xf32, #tpu.memory_space<vmem>>, vector<64x1xf32>
      %c0_60 = arith.constant 0 : index
      %c0_61 = arith.constant 0 : index
      %109 = vector.load %arg11[%c0_60, %c0_61] : memref<64x1xf32, #tpu.memory_space<vmem>>, vector<64x1xf32>
      %c0_62 = arith.constant 0 : index
      %c0_63 = arith.constant 0 : index
      %110 = vector.load %arg10[%c0_62, %c0_63] : memref<64x1xf32, #tpu.memory_space<vmem>>, vector<64x1xf32>
      %cst_64 = arith.constant 0.000000e+00 : f32
      %111 = vector.broadcast %cst_64 : f32 to vector<64x1xf32>
      %112 = arith.subf %111, %110 : vector<64x1xf32>
      %113 = math.exp %112 : vector<64x1xf32>
      %cst_65 = arith.constant 9.99999996E-13 : f32
      %114 = vector.broadcast %cst_65 : f32 to vector<64x1xf32>
      %115 = arith.mulf %114, %113 : vector<64x1xf32>
      %116 = arith.addf %109, %115 : vector<64x1xf32>
      %117 = arith.divf %108, %116 : vector<64x1xf32>
      %118 = arith.subf %107, %117 : vector<64x1xf32>
      %cst_66 = arith.constant 0.000000e+00 : f32
      %119 = vector.broadcast %cst_66 : f32 to vector<64x1xf32>
      %120 = arith.maximumf %118, %119 : vector<64x1xf32>
      %121 = math.absf %118 : vector<64x1xf32>
      %cst_67 = arith.constant 0.000000e+00 : f32
      %122 = vector.broadcast %cst_67 : f32 to vector<64x1xf32>
      %123 = arith.subf %122, %121 : vector<64x1xf32>
      %124 = math.exp %123 : vector<64x1xf32>
      %cst_68 = arith.constant 1.000000e+00 : f32
      %125 = vector.broadcast %cst_68 : f32 to vector<64x1xf32>
      %126 = arith.addf %125, %124 : vector<64x1xf32>
      %127 = math.log %126 : vector<64x1xf32>
      %128 = arith.addf %120, %127 : vector<64x1xf32>
      %c0_69 = arith.constant 0 : index
      %c0_70 = arith.constant 0 : index
      %129 = vector.load %arg6[%c0_69, %c0_70] : memref<64x1xf32, #tpu.memory_space<vmem>>, vector<64x1xf32>
      tpu.vector_store %arg6[%c0_69, %c0_70], %128 {strides = array<i32>} : memref<64x1xf32, #tpu.memory_space<vmem>>, vector<64x1xf32>,
    } else {
    }
    return
  }
  func.func @transform_0(%arg0: i32, %arg1: i32) -> (i32, i32) {
    %c0_i32 = arith.constant 0 : i32
    %c0_i32_0 = arith.constant 0 : i32
    return %arg0, %c0_i32 : i32, i32
  }
  func.func @transform_1(%arg0: i32, %arg1: i32) -> (i32, i32) {
    %c0_i32 = arith.constant 0 : i32
    %c0_i32_0 = arith.constant 0 : i32
    return %c0_i32, %arg1 : i32, i32
  }
  func.func @transform_2(%arg0: i32, %arg1: i32) -> (i32, i32) {
    %c0_i32 = arith.constant 0 : i32
    %c0_i32_0 = arith.constant 0 : i32
    return %arg0, %c0_i32 : i32, i32
  }
  func.func @transform_3(%arg0: i32, %arg1: i32) -> (i32, i32) {
    %c0_i32 = arith.constant 0 : i32
    %c0_i32_0 = arith.constant 0 : i32
    return %c0_i32, %arg1 : i32, i32
  }
  func.func @transform_4(%arg0: i32, %arg1: i32) -> (i32, i32) {
    %c0_i32 = arith.constant 0 : i32
    %c0_i32_0 = arith.constant 0 : i32
    return %arg0, %c0_i32 : i32, i32
  }
}

</mosaic_0001>

<llo_original>
// kernel: tpu_custom_call.1
$region0: #{tpu_custom_call.1}
  #allocation0 [shape = 'u32[]', space=smem, size = 0x4, offset = 0x4, fixed_abs, tag = 'smem constant byte address 0x4 - core index']
  #allocation1 [shape = 'u32[144,128]{1,0:T(1,128)}', space=vmem, size = 0x12000, scoped, tag = 'internal scratch']
  #allocation2 [shape = 'f32[64,1]{1,0:T(8,128)}', space=vmem, size = 0x8000, scoped, tag = 'scratch operand']
  #allocation3 [shape = 'f32[64,1]{1,0:T(8,128)}', space=vmem, size = 0x8000, scoped, tag = 'scratch operand']
  #allocation4 [shape = 'f32[64,1]{1,0:T(8,128)}', space=vmem, size = 0x8000, scoped, tag = 'scratch operand']
  #allocation5 [shape = 'f32[64,1]{1,0:T(8,128)}', space=vmem, size = 0x8000, scoped, tag = 'scratch operand']
  #allocation6 [shape = 'f32[64,1]{1,0:T(8,128)}', space=vmem, size = 0x8000, scoped, tag = 'scratch operand']
  #allocation7 [shape = 'f32[64,1]{1,0:T(8,128)}', space=vmem, size = 0x8000, scoped, tag = 'scratch operand']
  %s0 = inlined_call_operand.vmem [shape: f32[256,32], index: 0, kind: input, shape index: {}]
  %s1 = inlined_call_operand.vmem [shape: f32[32,256], index: 1, kind: input, shape index: {}]
  %s2 = inlined_call_operand.vmem [shape: s32[256,1], index: 2, kind: input, shape index: {}]
  %s3 = inlined_call_operand.vmem [shape: s32[1,256], index: 3, kind: input, shape index: {}]
  %s4 = inlined_call_operand.vmem [shape: f32[256,1], index: 4, kind: output, shape index: {}]
  %s5 = sld [smem:[#allocation0]]
  $region95: #{tpu_custom_call.1} parent=0
    _
  %s7 = ssub.s32 1, %s5
  %s8 = scalar_select 0, %s7, %s5
  $region1: #{tpu_custom_call.1} parent=0
    #allocation8 [shape = 'u8[32768]{0}', space=vmem, size = 0x8000, scoped, tag = 'input window, operand 1']
    loop: start=0, step=1, limit=10
    $region2: #{tpu_custom_call.1} parent=1 // loop_pre_header
      _
    $region3: #{tpu_custom_call.1} parent=1 // loop_header
      %s10 = sphi 0, %s14
      %p11 = scmp.ge.s32.totalorder %s10, 10
      %s17 = sphi 0, %s29
      %s18 = sphi 0, %s25
      %s19 = sphi 0, %s17
      %s20 = sphi 0, %s18
      %s21 = sphi 0, %s19
      %s22 = sphi 0, %s20
      %s32 = sphi 0, %s34
      %s35 = sphi 0, %s32
      %s36 = sphi 0, %s35
      %s52 = sphi 0, %s36
      %s58 = sphi 0, %s60
      %s61 = sphi 0, %s58
      %s62 = sphi 0, %s61
      %s78 = sphi 0, %s62
      %s84 = sphi 0, %s86
      %s87 = sphi 0, %s84
      %s88 = sphi 0, %s87
      %s104 = sphi 0, %s88
      %s110 = sphi 0, %s112
      %s113 = sphi 0, %s110
      %s114 = sphi 0, %s113
      %s130 = sphi 0, %s114
      %s136 = sphi 0, %s138
      %s139 = sphi 0, %s136
      %s140 = sphi 0, %s139
      %s156 = sphi 0, %s140
    $region4: #{tpu_custom_call.1} parent=1 // loop_header_branch
      %13 = sbr.rel (%p11) target = $region8
    $region5: #{tpu_custom_call.1} parent=1 // loop_body
      %s15 = ssub.s32 %s10, 1
      %s16 = ssub.s32 %s10, 2
      %s23 = sadd.s32 1, %s18
      %p24 = scmp.ge.s32.totalorder %s23, 2
      %s25 = scalar_select %p24, 0, %s23
      %s26 = sadd.s32 1, %s17
      %s27 = scalar_select %p24, %s26, %s17
      %p28 = scmp.ge.s32.totalorder %s27, 4
      %s29 = scalar_select %p28, 0, %s27
      %s30 = ssub.s32 %s17, %s29
      %p31 = scmp.eq.s32.totalorder %s30, 0
      %s33 = sadd.s32 %s32, 1
      %s34 = scalar_select %p31, %s32, %s33
      %p37 = pneg %p31
      %p38 = scmp.eq.s32.totalorder %s10, 7
      %p39 = por %p37, %p38
      %p40 = scmp.ne.s32.totalorder %s32, %s35
      %p41 = scmp.eq.s32.totalorder %s10, 0
      %p42 = por %p40, %p41
      %p43 = scmp.ne.s32.totalorder %s32, %s35
      %p44 = scmp.eq.s32.totalorder %s15, 7
      %p45 = por %p43, %p44
      %p46 = scmp.ne.s32.totalorder %s35, %s36
      %p47 = scmp.eq.s32.totalorder %s15, 0
      %p48 = por %p46, %p47
      %p49 = scmp.ne.s32.totalorder %s35, %s36
      %p50 = scmp.eq.s32.totalorder %s16, 7
      %p51 = por %p49, %p50
      %p53 = scmp.ne.s32.totalorder %s36, %s52
      %p54 = scmp.eq.s32.totalorder %s16, 0
      %p55 = por %p53, %p54
      %s56 = ssub.s32 %s18, %s25
      %p57 = scmp.eq.s32.totalorder %s56, 0
      %s59 = sadd.s32 %s58, 1
      %s60 = scalar_select %p57, %s58, %s59
      %p63 = pneg %p57
      %p64 = scmp.eq.s32.totalorder %s10, 7
      %p65 = por %p63, %p64
      %p66 = scmp.ne.s32.totalorder %s58, %s61
      %p67 = scmp.eq.s32.totalorder %s10, 0
      %p68 = por %p66, %p67
      %p69 = scmp.ne.s32.totalorder %s58, %s61
      %p70 = scmp.eq.s32.totalorder %s15, 7
      %p71 = por %p69, %p70
      %p72 = scmp.ne.s32.totalorder %s61, %s62
      %p73 = scmp.eq.s32.totalorder %s15, 0
      %p74 = por %p72, %p73
      %p75 = scmp.ne.s32.totalorder %s61, %s62
      %p76 = scmp.eq.s32.totalorder %s16, 7
      %p77 = por %p75, %p76
      %p79 = scmp.ne.s32.totalorder %s62, %s78
      %p80 = scmp.eq.s32.totalorder %s16, 0
      %p81 = por %p79, %p80
      %s82 = ssub.s32 %s17, %s29
      %p83 = scmp.eq.s32.totalorder %s82, 0
      %s85 = sadd.s32 %s84, 1
      %s86 = scalar_select %p83, %s84, %s85
      %p89 = pneg %p83
      %p90 = scmp.eq.s32.totalorder %s10, 7
      %p91 = por %p89, %p90
      %p92 = scmp.ne.s32.totalorder %s84, %s87
      %p93 = scmp.eq.s32.totalorder %s10, 0
      %p94 = por %p92, %p93
      %p95 = scmp.ne.s32.totalorder %s84, %s87
      %p96 = scmp.eq.s32.totalorder %s15, 7
      %p97 = por %p95, %p96
      %p98 = scmp.ne.s32.totalorder %s87, %s88
      %p99 = scmp.eq.s32.totalorder %s15, 0
      %p100 = por %p98, %p99
      %p101 = scmp.ne.s32.totalorder %s87, %s88
      %p102 = scmp.eq.s32.totalorder %s16, 7
      %p103 = por %p101, %p102
      %p105 = scmp.ne.s32.totalorder %s88, %s104
      %p106 = scmp.eq.s32.totalorder %s16, 0
      %p107 = por %p105, %p106
      %s108 = ssub.s32 %s18, %s25
      %p109 = scmp.eq.s32.totalorder %s108, 0
      %s111 = sadd.s32 %s110, 1
      %s112 = scalar_select %p109, %s110, %s111
      %p115 = pneg %p109
      %p116 = scmp.eq.s32.totalorder %s10, 7
      %p117 = por %p115, %p116
      %p118 = scmp.ne.s32.totalorder %s110, %s113
      %p119 = scmp.eq.s32.totalorder %s10, 0
      %p120 = por %p118, %p119
      %p121 = scmp.ne.s32.totalorder %s110, %s113
      %p122 = scmp.eq.s32.totalorder %s15, 7
      %p123 = por %p121, %p122
      %p124 = scmp.ne.s32.totalorder %s113, %s114
      %p125 = scmp.eq.s32.totalorder %s15, 0
      %p126 = por %p124, %p125
      %p127 = scmp.ne.s32.totalorder %s113, %s114
      %p128 = scmp.eq.s32.totalorder %s16, 7
      %p129 = por %p127, %p128
      %p131 = scmp.ne.s32.totalorder %s114, %s130
      %p132 = scmp.eq.s32.totalorder %s16, 0
      %p133 = por %p131, %p132
      %s134 = ssub.s32 %s17, %s29
      %p135 = scmp.eq.s32.totalorder %s134, 0
      %s137 = sadd.s32 %s136, 1
      %s138 = scalar_select %p135, %s136, %s137
      %p141 = pneg %p135
      %p142 = scmp.eq.s32.totalorder %s10, 7
      %p143 = por %p141, %p142
      %p144 = scmp.ne.s32.totalorder %s136, %s139
      %p145 = scmp.eq.s32.totalorder %s10, 0
      %p146 = por %p144, %p145
      %p147 = scmp.ne.s32.totalorder %s136, %s139
      %p148 = scmp.eq.s32.totalorder %s15, 7
      %p149 = por %p147, %p148
      %p150 = scmp.ne.s32.totalorder %s139, %s140
      %p151 = scmp.eq.s32.totalorder %s15, 0
      %p152 = por %p150, %p151
      %p153 = scmp.ne.s32.totalorder %s139, %s140
      %p154 = scmp.eq.s32.totalorder %s16, 7
      %p155 = por %p153, %p154
      %p157 = scmp.ne.s32.totalorder %s140, %s156
      %p158 = scmp.eq.s32.totalorder %s16, 0
      %p159 = por %p157, %p158
      %p160 = scmp.le.s32.totalorder 1, %s10
      %p161 = scmp.lt.s32.totalorder %s10, 9
      %p162 = pnand %p160, %p161
      %p163 = pneg %p162
      // Predicated region
      $region9: #{tpu_custom_call.1} parent=5 // pred_check
        _
      $region10: #{tpu_custom_call.1} parent=5 // pred_check_branch
        %165 = sbr.rel (%p162) target = $region12
      $region11: #{tpu_custom_call.1} parent=5 // pred_region
        %s166 = ssub.s32 %s10, 1
      $region12: #{tpu_custom_call.1} parent=5 // pred_fallthru
        _
      %p167 = scmp.lt.s32.totalorder %s10, 8
      // Predicated region
      $region13: #{tpu_custom_call.1} parent=5 // pred_check
        %p168 = pneg %p167
      $region14: #{tpu_custom_call.1} parent=5 // pred_check_branch
        %170 = sbr.rel (%p168) target = $region16
      $region15: #{tpu_custom_call.1} parent=5 // pred_region
        // Predicated region
        $region17: #{tpu_custom_call.1} parent=15 // pred_check
          %p171 = pneg %p42
        $region18: #{tpu_custom_call.1} parent=15 // pred_check_branch
          %173 = sbr.rel (%p171) target = $region20
        $region19: #{tpu_custom_call.1} parent=15 // pred_region
          %s174 = smul.u32 8, %s17
          %p175 = scmp.lt.s32.totalorder %s174, 31
          %s176 = scalar_select %p175, %s174, 31
          %s177 = smul.addr %s176, 8
          %s178 = scalar_lea.vmem %s0, %s177
          %s179 = smul.u32 8, %s17
        $region20: #{tpu_custom_call.1} parent=15 // pred_fallthru
          _
        // Predicated region
        $region21: #{tpu_custom_call.1} parent=15 // pred_check
          %p180 = pneg %p68
        $region22: #{tpu_custom_call.1} parent=15 // pred_check_branch
          %182 = sbr.rel (%p180) target = $region24
        $region23: #{tpu_custom_call.1} parent=15 // pred_region
          %s183 = sand.u32 %s58, 1
          %s184 = sand.u32 %s58, 1
          %s185 = smul.addr %s184, 32
          %s186 = scalar_lea.vmem [#allocation8], %s185
          %s187 = smul.addr %s18, 8
          %s188 = scalar_lea.vmem %s1, %s187
          // Predicated region
          $region25: #{tpu_custom_call.1} parent=23 // pred_check
            _
          $region26: #{tpu_custom_call.1} parent=23 // pred_check_branch
            %190 = sbr.rel (0) target = $region28
          $region27: #{tpu_custom_call.1} parent=23 // pred_region
            // Predicated region
            $region29: #{tpu_custom_call.1} parent=27 // pred_check
              _
            $region30: #{tpu_custom_call.1} parent=27 // pred_check_branch
              %192 = sbr.rel (0) target = $region32
            $region31: #{tpu_custom_call.1} parent=27 // pred_region
              // Predicated region
              $region44: #{tpu_custom_call.1} parent=31 // pred_check
                _
              $region45: #{tpu_custom_call.1} parent=31 // pred_check_branch
                %213 = sbr.rel (0) target = $region47
              $region46: #{tpu_custom_call.1} parent=31 // pred_region
                loop: start=0, step=1, limit=1
                $region48: #{tpu_custom_call.1} parent=46 // loop_pre_header
                  _
                $region49: #{tpu_custom_call.1} parent=46 // loop_header
                  %s215 = sphi 0, %s219
                  %p216 = scmp.ge.s32.totalorder %s215, 1
                  %s220 = sphi %s188, %s188
                  %s221 = sphi %s186, %s186
                $region50: #{tpu_custom_call.1} parent=46 // loop_header_branch
                  %218 = sbr.rel (%p216) target = $region54
                $region51: #{tpu_custom_call.1} parent=46 // loop_body
                  %v222 = vld [vmem:[%s220] sm:$0xff]
                  %223 = vst [vmem:[%s221] sm:$0xff] %v222
                  %v224 = vld [vmem:[%s220 + $0x10] sm:$0xff]
                  %225 = vst [vmem:[%s221 + $0x8] sm:$0xff] %v224
                  %v226 = vld [vmem:[%s220 + $0x20] sm:$0xff]
                  %227 = vst [vmem:[%s221 + $0x10] sm:$0xff] %v226
                  %v228 = vld [vmem:[%s220 + $0x30] sm:$0xff]
                  %229 = vst [vmem:[%s221 + $0x18] sm:$0xff] %v228
                $region52: #{tpu_custom_call.1} parent=46 // loop_footer
                  %s219 = sadd.s32 1, %s215
                $region53: #{tpu_custom_call.1} parent=46 // loop_footer_branch
                  %214 = sbr.rel target = $region49
                $region54: #{tpu_custom_call.1} parent=46 // loop_exit
                  _
              $region47: #{tpu_custom_call.1} parent=31 // pred_fallthru
                _
              // Predicated region
              $region55: #{tpu_custom_call.1} parent=31 // pred_check
                _
              $region56: #{tpu_custom_call.1} parent=31 // pred_check_branch
                %231 = sbr.rel target = $region58
              $region57: #{tpu_custom_call.1} parent=31 // pred_region
                _
              $region58: #{tpu_custom_call.1} parent=31 // pred_fallthru
                _
            $region32: #{tpu_custom_call.1} parent=27 // pred_fallthru
              _
            // Predicated region
            $region33: #{tpu_custom_call.1} parent=27 // pred_check
              _
            $region34: #{tpu_custom_call.1} parent=27 // pred_check_branch
              %194 = sbr.rel target = $region36
            $region35: #{tpu_custom_call.1} parent=27 // pred_region
              loop: start=0, step=1, limit=1
              $region37: #{tpu_custom_call.1} parent=35 // loop_pre_header
                _
              $region38: #{tpu_custom_call.1} parent=35 // loop_header
                %s197 = sphi 0, %s201
                %p198 = scmp.ge.s32.totalorder %s197, 1
                %s202 = sphi %s188, %s188
                %s203 = sphi %s186, %s186
              $region39: #{tpu_custom_call.1} parent=35 // loop_header_branch
                %200 = sbr.rel (%p198) target = $region43
              $region40: #{tpu_custom_call.1} parent=35 // loop_body
                %v204 = vld [vmem:[%s202] sm:$0xff]
                %205 = vst [vmem:[%s203] sm:$0xff] %v204
                %v206 = vld [vmem:[%s202 + $0x10] sm:$0xff]
                %207 = vst [vmem:[%s203 + $0x8] sm:$0xff] %v206
                %v208 = vld [vmem:[%s202 + $0x20] sm:$0xff]
                %209 = vst [vmem:[%s203 + $0x10] sm:$0xff] %v208
                %v210 = vld [vmem:[%s202 + $0x30] sm:$0xff]
                %211 = vst [vmem:[%s203 + $0x18] sm:$0xff] %v210
              $region41: #{tpu_custom_call.1} parent=35 // loop_footer
                %s201 = sadd.s32 1, %s197
              $region42: #{tpu_custom_call.1} parent=35 // loop_footer_branch
                %196 = sbr.rel target = $region38
              $region43: #{tpu_custom_call.1} parent=35 // loop_exit
                _
            $region36: #{tpu_custom_call.1} parent=27 // pred_fallthru
              _
          $region28: #{tpu_custom_call.1} parent=23 // pred_fallthru
            _
          %232 = vnop
        $region24: #{tpu_custom_call.1} parent=15 // pred_fallthru
          _
        // Predicated region
        $region59: #{tpu_custom_call.1} parent=15 // pred_check
          %p233 = pneg %p94
        $region60: #{tpu_custom_call.1} parent=15 // pred_check_branch
          %235 = sbr.rel (%p233) target = $region62
        $region61: #{tpu_custom_call.1} parent=15 // pred_region
          %s236 = smul.u32 8, %s17
          %p237 = scmp.lt.s32.totalorder %s236, 31
          %s238 = scalar_select %p237, %s236, 31
          %s239 = smul.addr %s238, 8
          %s240 = scalar_lea.vmem %s2, %s239
          %s241 = smul.u32 8, %s17
        $region62: #{tpu_custom_call.1} parent=15 // pred_fallthru
          _
        // Predicated region
        $region63: #{tpu_custom_call.1} parent=15 // pred_check
          %p242 = pneg %p120
        $region64: #{tpu_custom_call.1} parent=15 // pred_check_branch
          %244 = sbr.rel (%p242) target = $region66
        $region65: #{tpu_custom_call.1} parent=15 // pred_region
          %p245 = scmp.lt.s32.totalorder %s18, 1
          %s246 = scalar_select %p245, %s18, 1
          %s247 = scalar_lea.vmem %s3, %s246
        $region66: #{tpu_custom_call.1} parent=15 // pred_fallthru
          _
      $region16: #{tpu_custom_call.1} parent=5 // pred_fallthru
        _
      %p248 = scmp.le.s32.totalorder 1, %s10
      %p249 = scmp.lt.s32.totalorder %s10, 9
      %p250 = pnand %p248, %p249
      %p251 = pneg %p250
      // Predicated region
      $region67: #{tpu_custom_call.1} parent=5 // pred_check
        _
      $region68: #{tpu_custom_call.1} parent=5 // pred_check_branch
        %253 = sbr.rel (%p250) target = $region70
      $region69: #{tpu_custom_call.1} parent=5 // pred_region
        %s254 = ssub.s32 %s10, 1
        %s255 = sand.u32 %s61, 1
        %s256 = sand.u32 %s61, 1
        %s257 = smul.addr %s256, 32
        %s258 = scalar_lea.vmem [#allocation8], %s257
        // Predicated region
        $region71: #{tpu_custom_call.1} parent=69 // pred_check
          %p259 = pneg %p74
        $region72: #{tpu_custom_call.1} parent=69 // pred_check_branch
          %261 = sbr.rel (%p259) target = $region74
        $region73: #{tpu_custom_call.1} parent=69 // pred_region
          _
        $region74: #{tpu_custom_call.1} parent=69 // pred_fallthru
          _
        %s262 = smul.u32 8, %s19
        %p263 = scmp.lt.s32.totalorder %s262, 31
        %s264 = scalar_select %p263, %s262, 31
        %s265 = smul.addr %s264, 8
        %s266 = scalar_lea.vmem %s0, %s265
        %p267 = pneg %p48
        %p268 = pneg %p45
        %s269 = sand.u32 %s61, 1
        %s270 = sand.u32 %s61, 1
        %s271 = smul.addr %s270, 32
        %s272 = scalar_lea.vmem [#allocation8], %s271
        %p273 = pneg %p74
        %p274 = pneg %p71
        %s275 = smul.u32 8, %s19
        %p276 = scmp.lt.s32.totalorder %s275, 31
        %s277 = scalar_select %p276, %s275, 31
        %s278 = smul.addr %s277, 8
        %s279 = scalar_lea.vmem %s2, %s278
        %p280 = pneg %p100
        %p281 = pneg %p97
        %p282 = scmp.lt.s32.totalorder %s20, 1
        %s283 = scalar_select %p282, %s20, 1
        %s284 = scalar_lea.vmem %s3, %s283
        %p285 = pneg %p126
        %p286 = pneg %p123
        %p287 = pneg %p152
        %p288 = pneg %p149
        %s289 = smul.u32 8, %s19
        %p290 = scmp.lt.s32.totalorder %s289, 31
        %s291 = scalar_select %p290, %s289, 31
        %s292 = smul.addr %s291, 8
        %s293 = scalar_lea.vmem %s4, %s292
        %s294 = smul.u32 8, %s19
        %p295 = scmp.lt.s32.totalorder %s294, 31
        %s296 = scalar_select %p295, %s294, 31
        %s297 = smul.addr %s296, 8
        %s298 = scalar_lea.vmem %s0, %s297
        %s299 = smul.u32 8, %s19
        %s300 = smul.u32 8, %s19
        %p301 = scmp.lt.s32.totalorder %s300, 31
        %s302 = scalar_select %p301, %s300, 31
        %s303 = smul.addr %s302, 8
        %s304 = scalar_lea.vmem %s2, %s303
        %s305 = smul.u32 8, %s19
        %p306 = scmp.lt.s32.totalorder %s20, 1
        %s307 = scalar_select %p306, %s20, 1
        %s308 = scalar_lea.vmem %s3, %s307
        %s309 = smul.u32 8, %s19
        %p310 = scmp.lt.s32.totalorder %s309, 31
        %s311 = scalar_select %p310, %s309, 31
        %s312 = smul.addr %s311, 8
        %s313 = scalar_lea.vmem %s4, %s312
        %s314 = smul.u32 8, %s19
        %p315 = scmp.eq.s32.totalorder %s20, 0
        // Predicated region
        $region75: #{tpu_custom_call.1} parent=69 // pred_check
          %p316 = pneg %p315
        $region76: #{tpu_custom_call.1} parent=69 // pred_check_branch
          %318 = sbr.rel (%p316) target = $region78
        $region77: #{tpu_custom_call.1} parent=69 // pred_region
          %vm319 = vcmask 7168
          %320 = vst.msk [vmem:[#allocation2] sm:$0xff] %vm319, -1e+30
          %321 = vst.msk [vmem:[#allocation2 + $0x8] sm:$0xff] %vm319, -1e+30
          %322 = vst.msk [vmem:[#allocation2 + $0x10] sm:$0xff] %vm319, -1e+30
          %323 = vst.msk [vmem:[#allocation2 + $0x18] sm:$0xff] %vm319, -1e+30
          %324 = vst.msk [vmem:[#allocation2 + $0x20] sm:$0xff] %vm319, -1e+30
          %325 = vst.msk [vmem:[#allocation2 + $0x28] sm:$0xff] %vm319, -1e+30
          %326 = vst.msk [vmem:[#allocation2 + $0x30] sm:$0xff] %vm319, -1e+30
          %327 = vst.msk [vmem:[#allocation2 + $0x38] sm:$0xff] %vm319, -1e+30
          %328 = vst.msk [vmem:[#allocation5] sm:$0xff] %vm319, -1e+30
          %329 = vst.msk [vmem:[#allocation5 + $0x8] sm:$0xff] %vm319, -1e+30
          %330 = vst.msk [vmem:[#allocation5 + $0x10] sm:$0xff] %vm319, -1e+30
          %331 = vst.msk [vmem:[#allocation5 + $0x18] sm:$0xff] %vm319, -1e+30
          %332 = vst.msk [vmem:[#allocation5 + $0x20] sm:$0xff] %vm319, -1e+30
          %333 = vst.msk [vmem:[#allocation5 + $0x28] sm:$0xff] %vm319, -1e+30
          %334 = vst.msk [vmem:[#allocation5 + $0x30] sm:$0xff] %vm319, -1e+30
          %335 = vst.msk [vmem:[#allocation5 + $0x38] sm:$0xff] %vm319, -1e+30
          %336 = vst.msk [vmem:[#allocation3] sm:$0xff] %vm319, 0.0
          %337 = vst.msk [vmem:[#allocation3 + $0x8] sm:$0xff] %vm319, 0.0
          %338 = vst.msk [vmem:[#allocation3 + $0x10] sm:$0xff] %vm319, 0.0
          %339 = vst.msk [vmem:[#allocation3 + $0x18] sm:$0xff] %vm319, 0.0
          %340 = vst.msk [vmem:[#allocation3 + $0x20] sm:$0xff] %vm319, 0.0
          %341 = vst.msk [vmem:[#allocation3 + $0x28] sm:$0xff] %vm319, 0.0
          %342 = vst.msk [vmem:[#allocation3 + $0x30] sm:$0xff] %vm319, 0.0
          %343 = vst.msk [vmem:[#allocation3 + $0x38] sm:$0xff] %vm319, 0.0
          %344 = vst.msk [vmem:[#allocation4] sm:$0xff] %vm319, 0.0
          %345 = vst.msk [vmem:[#allocation4 + $0x8] sm:$0xff] %vm319, 0.0
          %346 = vst.msk [vmem:[#allocation4 + $0x10] sm:$0xff] %vm319, 0.0
          %347 = vst.msk [vmem:[#allocation4 + $0x18] sm:$0xff] %vm319, 0.0
          %348 = vst.msk [vmem:[#allocation4 + $0x20] sm:$0xff] %vm319, 0.0
          %349 = vst.msk [vmem:[#allocation4 + $0x28] sm:$0xff] %vm319, 0.0
          %350 = vst.msk [vmem:[#allocation4 + $0x30] sm:$0xff] %vm319, 0.0
          %351 = vst.msk [vmem:[#allocation4 + $0x38] sm:$0xff] %vm319, 0.0
          %352 = vst.msk [vmem:[#allocation6] sm:$0xff] %vm319, 0.0
          %353 = vst.msk [vmem:[#allocation6 + $0x8] sm:$0xff] %vm319, 0.0
          %354 = vst.msk [vmem:[#allocation6 + $0x10] sm:$0xff] %vm319, 0.0
          %355 = vst.msk [vmem:[#allocation6 + $0x18] sm:$0xff] %vm319, 0.0
          %356 = vst.msk [vmem:[#allocation6 + $0x20] sm:$0xff] %vm319, 0.0
          %357 = vst.msk [vmem:[#allocation6 + $0x28] sm:$0xff] %vm319, 0.0
          %358 = vst.msk [vmem:[#allocation6 + $0x30] sm:$0xff] %vm319, 0.0
          %359 = vst.msk [vmem:[#allocation6 + $0x38] sm:$0xff] %vm319, 0.0
          %360 = vst.msk [vmem:[#allocation7] sm:$0xff] %vm319, 0.0
          %361 = vst.msk [vmem:[#allocation7 + $0x8] sm:$0xff] %vm319, 0.0
          %362 = vst.msk [vmem:[#allocation7 + $0x10] sm:$0xff] %vm319, 0.0
          %363 = vst.msk [vmem:[#allocation7 + $0x18] sm:$0xff] %vm319, 0.0
          %364 = vst.msk [vmem:[#allocation7 + $0x20] sm:$0xff] %vm319, 0.0
          %365 = vst.msk [vmem:[#allocation7 + $0x28] sm:$0xff] %vm319, 0.0
          %366 = vst.msk [vmem:[#allocation7 + $0x30] sm:$0xff] %vm319, 0.0
          %367 = vst.msk [vmem:[#allocation7 + $0x38] sm:$0xff] %vm319, 0.0
        $region78: #{tpu_custom_call.1} parent=69 // pred_fallthru
          _
        %v368 = vld [vmem:[%s298] sm:$0xff]
        %v369 = vld [vmem:[%s298 + $0x8] sm:$0xff]
        %v370 = vld [vmem:[%s298 + $0x10] sm:$0xff]
        %v371 = vld [vmem:[%s298 + $0x18] sm:$0xff]
        %v372 = vld [vmem:[%s298 + $0x20] sm:$0xff]
        %v373 = vld [vmem:[%s298 + $0x28] sm:$0xff]
        %v374 = vld [vmem:[%s298 + $0x30] sm:$0xff]
        %v375 = vld [vmem:[%s298 + $0x38] sm:$0xff]
        %v376 = vld [vmem:[%s258] sm:$0xff]
        %v377 = vld [vmem:[%s258 + $0x8] sm:$0xff]
        %v378 = vld [vmem:[%s258 + $0x10] sm:$0xff]
        %v379 = vld [vmem:[%s258 + $0x18] sm:$0xff]
        %vm380 = vcmask 261120
        %v382 = vsel %vm380, %v368, 0
        %v385 = vsel %vm380, %v369, 0
        %v388 = vsel %vm380, %v370, 0
        %v391 = vsel %vm380, %v371, 0
        %v394 = vsel %vm380, %v372, 0
        %v397 = vsel %vm380, %v373, 0
        %v400 = vsel %vm380, %v374, 0
        %v403 = vsel %vm380, %v375, 0
        %405 = vmatprep.subr.mxu0 0.0
        %406 = vmatpush1.msra.mxu0 %v376
        %407 = vmatprep.subr.mxu0 0.0
        %408 = vmatpush1.msra.mxu0 %v377
        %409 = vmatprep.subr.mxu0 0.0
        %410 = vmatpush1.msra.mxu0 %v378
        %411 = vmatprep.subr.mxu0 0.0
        %412 = vmatpush1.msra.mxu0 %v379
        %413 = vmatprep.subr.mxu0 0.0
        %414 = vmatpush1.msra.mxu0 0.0
        %415 = vmatprep.subr.mxu0 0.0
        %416 = vmatpush1.msra.mxu0 0.0
        %417 = vmatprep.subr.mxu0 0.0
        %418 = vmatpush1.msra.mxu0 0.0
        %419 = vmatprep.subr.mxu0 0.0
        %420 = vmatpush1.msra.mxu0 0.0
        %421 = vmatprep.subr.mxu0 0.0
        %422 = vmatpush1.msra.mxu0 0.0
        %423 = vmatprep.subr.mxu0 0.0
        %424 = vmatpush1.msra.mxu0 0.0
        %425 = vmatprep.subr.mxu0 0.0
        %426 = vmatpush1.msra.mxu0 0.0
        %427 = vmatprep.subr.mxu0 0.0
        %428 = vmatpush1.msra.mxu0 0.0
        %429 = vmatprep.subr.mxu0 0.0
        %430 = vmatpush1.msra.mxu0 0.0
        %431 = vmatprep.subr.mxu0 0.0
        %432 = vmatpush1.msra.mxu0 0.0
        %433 = vmatprep.subr.mxu0 0.0
        %434 = vmatpush1.msra.mxu0 0.0
        %435 = vmatprep.subr.mxu0 0.0
        %436 = vmatpush1.msra.mxu0 0.0
        %437 = vmatprep.subr.mxu0 0.0
        %438 = vmatpush1.msra.mxu0 0.0
        %439 = vmatprep.subr.mxu0 0.0
        %440 = vmatpush1.msra.mxu0 0.0
        %441 = vmatprep.subr.mxu0 0.0
        %442 = vmatpush1.msra.mxu0 0.0
        %443 = vmatprep.subr.mxu0 0.0
        %444 = vmatpush1.msra.mxu0 0.0
        %445 = vmatprep.subr.mxu0 0.0
        %446 = vmatpush1.msra.mxu0 0.0
        %447 = vmatprep.subr.mxu0 0.0
        %448 = vmatpush1.msra.mxu0 0.0
        %449 = vmatprep.subr.mxu0 0.0
        %450 = vmatpush1.msra.mxu0 0.0
        %451 = vmatprep.subr.mxu0 0.0
        %452 = vmatpush1.msra.mxu0 0.0
        %453 = vmatprep.subr.mxu0 0.0
        %454 = vmatpush1.msra.mxu0 0.0
        %455 = vmatprep.subr.mxu0 0.0
        %456 = vmatpush1.msra.mxu0 0.0
        %457 = vmatprep.subr.mxu0 0.0
        %458 = vmatpush1.msra.mxu0 0.0
        %459 = vmatprep.subr.mxu0 0.0
        %460 = vmatpush1.msra.mxu0 0.0
        %461 = vmatprep.subr.mxu0 0.0
        %462 = vmatpush1.msra.mxu0 0.0
        %463 = vmatprep.subr.mxu0 0.0
        %464 = vmatpush1.msra.mxu0 0.0
        %465 = vmatprep.subr.mxu0 0.0
        %466 = vmatpush1.msra.mxu0 0.0
        %467 = vmatprep.subr.mxu0 0.0
        %468 = vmatpush1.msra.mxu0 0.0
        %469 = vmatprep.mubr.f32.mxu0 0.0
        %470 = vmatmul.mubr.f32.gmra.mrb[0].mxu0 %v382
        %v471 = vpop.f32.mrb[0].mxu0
        %v472 = vadd.f32 0.0, %v471
        %v473 = vpop.f32.mrb[0].mxu0
        %474 = vmatprep.mubr.f32.mxu0 0.0
        %475 = vmatmul.mubr.f32.gmra.mrb[0].mxu0 %v385
        %v476 = vpop.f32.mrb[0].mxu0
        %v477 = vadd.f32 0.0, %v476
        %v478 = vpop.f32.mrb[0].mxu0
        %479 = vmatprep.mubr.f32.mxu0 0.0
        %480 = vmatmul.mubr.f32.gmra.mrb[0].mxu0 %v388
        %v481 = vpop.f32.mrb[0].mxu0
        %v482 = vadd.f32 0.0, %v481
        %v483 = vpop.f32.mrb[0].mxu0
        %484 = vmatprep.mubr.f32.mxu0 0.0
        %485 = vmatmul.mubr.f32.gmra.mrb[0].mxu0 %v391
        %v486 = vpop.f32.mrb[0].mxu0
        %v487 = vadd.f32 0.0, %v486
        %v488 = vpop.f32.mrb[0].mxu0
        %489 = vmatprep.mubr.f32.mxu0 0.0
        %490 = vmatmul.mubr.f32.gmra.mrb[0].mxu0 %v394
        %v491 = vpop.f32.mrb[0].mxu0
        %v492 = vadd.f32 0.0, %v491
        %v493 = vpop.f32.mrb[0].mxu0
        %494 = vmatprep.mubr.f32.mxu0 0.0
        %495 = vmatmul.mubr.f32.gmra.mrb[0].mxu0 %v397
        %v496 = vpop.f32.mrb[0].mxu0
        %v497 = vadd.f32 0.0, %v496
        %v498 = vpop.f32.mrb[0].mxu0
        %499 = vmatprep.mubr.f32.mxu0 0.0
        %500 = vmatmul.mubr.f32.gmra.mrb[0].mxu0 %v400
        %v501 = vpop.f32.mrb[0].mxu0
        %v502 = vadd.f32 0.0, %v501
        %v503 = vpop.f32.mrb[0].mxu0
        %504 = vmatprep.mubr.f32.mxu0 0.0
        %505 = vmatmul.mubr.f32.gmra.mrb[0].mxu0 %v403
        %v506 = vpop.f32.mrb[0].mxu0
        %v507 = vadd.f32 0.0, %v506
        %v508 = vpop.f32.mrb[0].mxu0
        %509 = vdwg.mxu0
        %v510 = vmul.f32 %v368, %v368
        %v511 = vmul.f32 %v369, %v369
        %v512 = vmul.f32 %v370, %v370
        %v513 = vmul.f32 %v371, %v371
        %v514 = vmul.f32 %v372, %v372
        %v515 = vmul.f32 %v373, %v373
        %v516 = vmul.f32 %v374, %v374
        %v517 = vmul.f32 %v375, %v375
        %v518 = vsel %vm380, %v510, 0.0
        %519 = vadd.xlane.f32.xlu0 %v518
        %v520 = vpop.xlane.xlu0 %519
        %v521 = vsel %vm380, %v511, 0.0
        %522 = vadd.xlane.f32.xlu0 %v521
        %v523 = vpop.xlane.xlu0 %522
        %v524 = vsel %vm380, %v512, 0.0
        %525 = vadd.xlane.f32.xlu0 %v524
        %v526 = vpop.xlane.xlu0 %525
        %v527 = vsel %vm380, %v513, 0.0
        %528 = vadd.xlane.f32.xlu0 %v527
        %v529 = vpop.xlane.xlu0 %528
        %v530 = vsel %vm380, %v514, 0.0
        %531 = vadd.xlane.f32.xlu0 %v530
        %v532 = vpop.xlane.xlu0 %531
        %v533 = vsel %vm380, %v515, 0.0
        %534 = vadd.xlane.f32.xlu0 %v533
        %v535 = vpop.xlane.xlu0 %534
        %v536 = vsel %vm380, %v516, 0.0
        %537 = vadd.xlane.f32.xlu0 %v536
        %v538 = vpop.xlane.xlu0 %537
        %v539 = vsel %vm380, %v517, 0.0
        %540 = vadd.xlane.f32.xlu0 %v539
        %v541 = vpop.xlane.xlu0 %540
        %v542 = vmul.f32 %v376, %v376
        %v543 = vmul.f32 %v377, %v377
        %v544 = vmul.f32 %v378, %v378
        %v545 = vmul.f32 %v379, %v379
        %v546 = vadd.f32 %v542, %v543
        %v547 = vadd.f32 %v546, %v544
        %v548 = vadd.f32 %v547, %v545
        %v549 = vrot.slane %v548, 4
        %v550 = vadd.f32 %v548, %v549
        %v551 = vrot.slane %v550, 2
        %v552 = vadd.f32 %v550, %v551
        %v553 = vrot.slane %v552, 1
        %v554 = vadd.f32 %v552, %v553
        %v555 = vadd.f32 %v520, %v554
        %v556 = vadd.f32 %v523, %v554
        %v557 = vadd.f32 %v526, %v554
        %v558 = vadd.f32 %v529, %v554
        %v559 = vadd.f32 %v532, %v554
        %v560 = vadd.f32 %v535, %v554
        %v561 = vadd.f32 %v538, %v554
        %v562 = vadd.f32 %v541, %v554
        %v563 = vmul.f32 %v472, 2.0
        %v564 = vmul.f32 %v477, 2.0
        %v565 = vmul.f32 %v482, 2.0
        %v566 = vmul.f32 %v487, 2.0
        %v567 = vmul.f32 %v492, 2.0
        %v568 = vmul.f32 %v497, 2.0
        %v569 = vmul.f32 %v502, 2.0
        %v570 = vmul.f32 %v507, 2.0
        %v571 = vsub.f32 %v555, %v563
        %v572 = vsub.f32 %v556, %v564
        %v573 = vsub.f32 %v557, %v565
        %v574 = vsub.f32 %v558, %v566
        %v575 = vsub.f32 %v559, %v567
        %v576 = vsub.f32 %v560, %v568
        %v577 = vsub.f32 %v561, %v569
        %v578 = vsub.f32 %v562, %v570
        %v579 = vmax.f32 %v571, 1e-12
        %v580 = vmax.f32 %v572, 1e-12
        %v581 = vmax.f32 %v573, 1e-12
        %v582 = vmax.f32 %v574, 1e-12
        %v583 = vmax.f32 %v575, 1e-12
        %v584 = vmax.f32 %v576, 1e-12
        %v585 = vmax.f32 %v577, 1e-12
        %v586 = vmax.f32 %v578, 1e-12
        %v587 = vrsqrt.pop %v579
        %v588 = vmul.f32 %v579, %v587
        %vm589 = vcmp.eq.f32.partialorder %v579, inf
        %v590 = vsel %vm589, %v579, %v588
        %vm591 = vcmp.eq.f32.partialorder %v579, 0.0
        %v592 = vand.u32 %v579, 2147483648
        %v593 = vsel %vm591, %v592, %v590
        %v594 = vrsqrt.pop %v580
        %v595 = vmul.f32 %v580, %v594
        %vm596 = vcmp.eq.f32.partialorder %v580, inf
        %v597 = vsel %vm596, %v580, %v595
        %vm598 = vcmp.eq.f32.partialorder %v580, 0.0
        %v599 = vand.u32 %v580, 2147483648
        %v600 = vsel %vm598, %v599, %v597
        %v601 = vrsqrt.pop %v581
        %v602 = vmul.f32 %v581, %v601
        %vm603 = vcmp.eq.f32.partialorder %v581, inf
        %v604 = vsel %vm603, %v581, %v602
        %vm605 = vcmp.eq.f32.partialorder %v581, 0.0
        %v606 = vand.u32 %v581, 2147483648
        %v607 = vsel %vm605, %v606, %v604
        %v608 = vrsqrt.pop %v582
        %v609 = vmul.f32 %v582, %v608
        %vm610 = vcmp.eq.f32.partialorder %v582, inf
        %v611 = vsel %vm610, %v582, %v609
        %vm612 = vcmp.eq.f32.partialorder %v582, 0.0
        %v613 = vand.u32 %v582, 2147483648
        %v614 = vsel %vm612, %v613, %v611
        %v615 = vrsqrt.pop %v583
        %v616 = vmul.f32 %v583, %v615
        %vm617 = vcmp.eq.f32.partialorder %v583, inf
        %v618 = vsel %vm617, %v583, %v616
        %vm619 = vcmp.eq.f32.partialorder %v583, 0.0
        %v620 = vand.u32 %v583, 2147483648
        %v621 = vsel %vm619, %v620, %v618
        %v622 = vrsqrt.pop %v584
        %v623 = vmul.f32 %v584, %v622
        %vm624 = vcmp.eq.f32.partialorder %v584, inf
        %v625 = vsel %vm624, %v584, %v623
        %vm626 = vcmp.eq.f32.partialorder %v584, 0.0
        %v627 = vand.u32 %v584, 2147483648
        %v628 = vsel %vm626, %v627, %v625
        %v629 = vrsqrt.pop %v585
        %v630 = vmul.f32 %v585, %v629
        %vm631 = vcmp.eq.f32.partialorder %v585, inf
        %v632 = vsel %vm631, %v585, %v630
        %vm633 = vcmp.eq.f32.partialorder %v585, 0.0
        %v634 = vand.u32 %v585, 2147483648
        %v635 = vsel %vm633, %v634, %v632
        %v636 = vrsqrt.pop %v586
        %v637 = vmul.f32 %v586, %v636
        %vm638 = vcmp.eq.f32.partialorder %v586, inf
        %v639 = vsel %vm638, %v586, %v637
        %vm640 = vcmp.eq.f32.partialorder %v586, 0.0
        %v641 = vand.u32 %v586, 2147483648
        %v642 = vsel %vm640, %v641, %v639
        %v643 = vld [vmem:[%s304] sm:$0xff]
        %v644 = vld [vmem:[%s304 + $0x8] sm:$0xff]
        %v645 = vld [vmem:[%s304 + $0x10] sm:$0xff]
        %v646 = vld [vmem:[%s304 + $0x18] sm:$0xff]
        %v647 = vld [vmem:[%s304 + $0x20] sm:$0xff]
        %v648 = vld [vmem:[%s304 + $0x28] sm:$0xff]
        %v649 = vld [vmem:[%s304 + $0x30] sm:$0xff]
        %v650 = vld [vmem:[%s304 + $0x38] sm:$0xff]
        %v651 = vld [vmem:[%s308] sm:$0x1]
        %v652 = vlaneseq
        %v653 = vand.u32 %v652, 127
        %s654 = smul.u32 %s20, 128
        %v655 = vstv %s654
        %v656 = vadd.s32 %v653, %v655
        %vm657 = vcmp.lt.s32.totalorder %v656, 256
        %658 = vset.pattern.permute.xlu0 0
        %659 = vperm.xlu0 %658, %v643
        %v660 = vpop.permute.xlu0 %659
        %661 = vset.pattern.permute.xlu0 0
        %662 = vperm.xlu0 %661, %v644
        %v663 = vpop.permute.xlu0 %662
        %664 = vset.pattern.permute.xlu0 0
        %665 = vperm.xlu0 %664, %v645
        %v666 = vpop.permute.xlu0 %665
        %667 = vset.pattern.permute.xlu0 0
        %668 = vperm.xlu0 %667, %v646
        %v669 = vpop.permute.xlu0 %668
        %670 = vset.pattern.permute.xlu0 0
        %671 = vperm.xlu0 %670, %v647
        %v672 = vpop.permute.xlu0 %671
        %673 = vset.pattern.permute.xlu0 0
        %674 = vperm.xlu0 %673, %v648
        %v675 = vpop.permute.xlu0 %674
        %676 = vset.pattern.permute.xlu0 0
        %677 = vperm.xlu0 %676, %v649
        %v678 = vpop.permute.xlu0 %677
        %679 = vset.pattern.permute.xlu0 0
        %680 = vperm.xlu0 %679, %v650
        %v681 = vpop.permute.xlu0 %680
        %v682 = vlaneseq
        %v683 = vshrl.u32 %v682, 7
        %v684 = vsub.s32 0, %v683
        %v685 = vrot.slane %v651, %v684
        %vm686 = vcmp.eq.s32.totalorder %v660, %v685
        %vm687 = vcmp.eq.s32.totalorder %v663, %v685
        %vm688 = vcmp.eq.s32.totalorder %v666, %v685
        %vm689 = vcmp.eq.s32.totalorder %v669, %v685
        %vm690 = vcmp.eq.s32.totalorder %v672, %v685
        %vm691 = vcmp.eq.s32.totalorder %v675, %v685
        %vm692 = vcmp.eq.s32.totalorder %v678, %v685
        %vm693 = vcmp.eq.s32.totalorder %v681, %v685
        %v694 = vsel %vm657, 1, 0
        %vm695 = vcmp.eq.s32.totalorder %v694, 1
        %vm696 = vmand %vm686, %vm695
        %vm697 = vmand %vm687, %vm695
        %vm698 = vmand %vm688, %vm695
        %vm699 = vmand %vm689, %vm695
        %vm700 = vmand %vm690, %vm695
        %vm701 = vmand %vm691, %vm695
        %vm702 = vmand %vm692, %vm695
        %vm703 = vmand %vm693, %vm695
        %vm704 = vmxor %vm686, 1
        %vm705 = vmxor %vm687, 1
        %vm706 = vmxor %vm688, 1
        %vm707 = vmxor %vm689, 1
        %vm708 = vmxor %vm690, 1
        %vm709 = vmxor %vm691, 1
        %vm710 = vmxor %vm692, 1
        %vm711 = vmxor %vm693, 1
        %vm712 = vmand %vm704, %vm695
        %vm713 = vmand %vm705, %vm695
        %vm714 = vmand %vm706, %vm695
        %vm715 = vmand %vm707, %vm695
        %vm716 = vmand %vm708, %vm695
        %vm717 = vmand %vm709, %vm695
        %vm718 = vmand %vm710, %vm695
        %vm719 = vmand %vm711, %vm695
        %v720 = vld [vmem:[#allocation2] sm:$0xff]
        %v721 = vld [vmem:[#allocation2 + $0x8] sm:$0xff]
        %v722 = vld [vmem:[#allocation2 + $0x10] sm:$0xff]
        %v723 = vld [vmem:[#allocation2 + $0x18] sm:$0xff]
        %v724 = vld [vmem:[#allocation2 + $0x20] sm:$0xff]
        %v725 = vld [vmem:[#allocation2 + $0x28] sm:$0xff]
        %v726 = vld [vmem:[#allocation2 + $0x30] sm:$0xff]
        %v727 = vld [vmem:[#allocation2 + $0x38] sm:$0xff]
        %v728 = vsel %vm696, %v593, -1e+30
        %v729 = vsel %vm697, %v600, -1e+30
        %v730 = vsel %vm698, %v607, -1e+30
        %v731 = vsel %vm699, %v614, -1e+30
        %v732 = vsel %vm700, %v621, -1e+30
        %v733 = vsel %vm701, %v628, -1e+30
        %v734 = vsel %vm702, %v635, -1e+30
        %v735 = vsel %vm703, %v642, -1e+30
        %736 = vmax.xlane.f32.xlu0 %v728
        %v737 = vpop.xlane.xlu0 %736
        %738 = vmax.xlane.f32.xlu0 %v729
        %v739 = vpop.xlane.xlu0 %738
        %740 = vmax.xlane.f32.xlu0 %v730
        %v741 = vpop.xlane.xlu0 %740
        %742 = vmax.xlane.f32.xlu0 %v731
        %v743 = vpop.xlane.xlu0 %742
        %744 = vmax.xlane.f32.xlu0 %v732
        %v745 = vpop.xlane.xlu0 %744
        %746 = vmax.xlane.f32.xlu0 %v733
        %v747 = vpop.xlane.xlu0 %746
        %748 = vmax.xlane.f32.xlu0 %v734
        %v749 = vpop.xlane.xlu0 %748
        %750 = vmax.xlane.f32.xlu0 %v735
        %v751 = vpop.xlane.xlu0 %750
        %v752 = vmax.f32 %v720, %v737
        %v753 = vmax.f32 %v721, %v739
        %v754 = vmax.f32 %v722, %v741
        %v755 = vmax.f32 %v723, %v743
        %v756 = vmax.f32 %v724, %v745
        %v757 = vmax.f32 %v725, %v747
        %v758 = vmax.f32 %v726, %v749
        %v759 = vmax.f32 %v727, %v751
        %v760 = vsub.f32 %v720, %v752
        %v761 = vsub.f32 %v721, %v753
        %v762 = vsub.f32 %v722, %v754
        %v763 = vsub.f32 %v723, %v755
        %v764 = vsub.f32 %v724, %v756
        %v765 = vsub.f32 %v725, %v757
        %v766 = vsub.f32 %v726, %v758
        %v767 = vsub.f32 %v727, %v759
        %v768 = vmul.f32 %v760, 1.442695
        %v769 = vpow.pop %v768
        %v770 = vmul.f32 %v761, 1.442695
        %v771 = vpow.pop %v770
        %v772 = vmul.f32 %v762, 1.442695
        %v773 = vpow.pop %v772
        %v774 = vmul.f32 %v763, 1.442695
        %v775 = vpow.pop %v774
        %v776 = vmul.f32 %v764, 1.442695
        %v777 = vpow.pop %v776
        %v778 = vmul.f32 %v765, 1.442695
        %v779 = vpow.pop %v778
        %v780 = vmul.f32 %v766, 1.442695
        %v781 = vpow.pop %v780
        %v782 = vmul.f32 %v767, 1.442695
        %v783 = vpow.pop %v782
        %785 = vset.pattern.permute.xlu0 0
        %786 = vperm.xlu0 %785, %v752
        %v787 = vpop.permute.xlu0 %786
        %790 = vset.pattern.permute.xlu0 0
        %791 = vperm.xlu0 %790, %v753
        %v792 = vpop.permute.xlu0 %791
        %795 = vset.pattern.permute.xlu0 0
        %796 = vperm.xlu0 %795, %v754
        %v797 = vpop.permute.xlu0 %796
        %800 = vset.pattern.permute.xlu0 0
        %801 = vperm.xlu0 %800, %v755
        %v802 = vpop.permute.xlu0 %801
        %805 = vset.pattern.permute.xlu0 0
        %806 = vperm.xlu0 %805, %v756
        %v807 = vpop.permute.xlu0 %806
        %810 = vset.pattern.permute.xlu0 0
        %811 = vperm.xlu0 %810, %v757
        %v812 = vpop.permute.xlu0 %811
        %815 = vset.pattern.permute.xlu0 0
        %816 = vperm.xlu0 %815, %v758
        %v817 = vpop.permute.xlu0 %816
        %820 = vset.pattern.permute.xlu0 0
        %821 = vperm.xlu0 %820, %v759
        %v822 = vpop.permute.xlu0 %821
        %v824 = vsub.f32 %v593, %v787
        %v825 = vsub.f32 %v600, %v792
        %v826 = vsub.f32 %v607, %v797
        %v827 = vsub.f32 %v614, %v802
        %v828 = vsub.f32 %v621, %v807
        %v829 = vsub.f32 %v628, %v812
        %v830 = vsub.f32 %v635, %v817
        %v831 = vsub.f32 %v642, %v822
        %v832 = vmul.f32 %v824, 1.442695
        %v833 = vpow.pop %v832
        %v834 = vmul.f32 %v825, 1.442695
        %v835 = vpow.pop %v834
        %v836 = vmul.f32 %v826, 1.442695
        %v837 = vpow.pop %v836
        %v838 = vmul.f32 %v827, 1.442695
        %v839 = vpow.pop %v838
        %v840 = vmul.f32 %v828, 1.442695
        %v841 = vpow.pop %v840
        %v842 = vmul.f32 %v829, 1.442695
        %v843 = vpow.pop %v842
        %v844 = vmul.f32 %v830, 1.442695
        %v845 = vpow.pop %v844
        %v846 = vmul.f32 %v831, 1.442695
        %v847 = vpow.pop %v846
        %v848 = vsel %vm696, %v833, 0.0
        %v849 = vsel %vm697, %v835, 0.0
        %v850 = vsel %vm698, %v837, 0.0
        %v851 = vsel %vm699, %v839, 0.0
        %v852 = vsel %vm700, %v841, 0.0
        %v853 = vsel %vm701, %v843, 0.0
        %v854 = vsel %vm702, %v845, 0.0
        %v855 = vsel %vm703, %v847, 0.0
        %v856 = vld [vmem:[#allocation3] sm:$0xff]
        %v857 = vld [vmem:[#allocation3 + $0x8] sm:$0xff]
        %v858 = vld [vmem:[#allocation3 + $0x10] sm:$0xff]
        %v859 = vld [vmem:[#allocation3 + $0x18] sm:$0xff]
        %v860 = vld [vmem:[#allocation3 + $0x20] sm:$0xff]
        %v861 = vld [vmem:[#allocation3 + $0x28] sm:$0xff]
        %v862 = vld [vmem:[#allocation3 + $0x30] sm:$0xff]
        %v863 = vld [vmem:[#allocation3 + $0x38] sm:$0xff]
        %v864 = vmul.f32 %v769, %v856
        %v865 = vmul.f32 %v771, %v857
        %v866 = vmul.f32 %v773, %v858
        %v867 = vmul.f32 %v775, %v859
        %v868 = vmul.f32 %v777, %v860
        %v869 = vmul.f32 %v779, %v861
        %v870 = vmul.f32 %v781, %v862
        %v871 = vmul.f32 %v783, %v863
        %872 = vadd.xlane.f32.xlu0 %v848
        %v873 = vpop.xlane.xlu0 %872
        %874 = vadd.xlane.f32.xlu0 %v849
        %v875 = vpop.xlane.xlu0 %874
        %876 = vadd.xlane.f32.xlu0 %v850
        %v877 = vpop.xlane.xlu0 %876
        %878 = vadd.xlane.f32.xlu0 %v851
        %v879 = vpop.xlane.xlu0 %878
        %880 = vadd.xlane.f32.xlu0 %v852
        %v881 = vpop.xlane.xlu0 %880
        %882 = vadd.xlane.f32.xlu0 %v853
        %v883 = vpop.xlane.xlu0 %882
        %884 = vadd.xlane.f32.xlu0 %v854
        %v885 = vpop.xlane.xlu0 %884
        %886 = vadd.xlane.f32.xlu0 %v855
        %v887 = vpop.xlane.xlu0 %886
        %v888 = vadd.f32 %v864, %v873
        %v889 = vadd.f32 %v865, %v875
        %v890 = vadd.f32 %v866, %v877
        %v891 = vadd.f32 %v867, %v879
        %v892 = vadd.f32 %v868, %v881
        %v893 = vadd.f32 %v869, %v883
        %v894 = vadd.f32 %v870, %v885
        %v895 = vadd.f32 %v871, %v887
        %vm896 = vcmask 7168
        %897 = vst.msk [vmem:[#allocation3] sm:$0xff] %vm896, %v888
        %898 = vst.msk [vmem:[#allocation3 + $0x8] sm:$0xff] %vm896, %v889
        %899 = vst.msk [vmem:[#allocation3 + $0x10] sm:$0xff] %vm896, %v890
        %900 = vst.msk [vmem:[#allocation3 + $0x18] sm:$0xff] %vm896, %v891
        %901 = vst.msk [vmem:[#allocation3 + $0x20] sm:$0xff] %vm896, %v892
        %902 = vst.msk [vmem:[#allocation3 + $0x28] sm:$0xff] %vm896, %v893
        %903 = vst.msk [vmem:[#allocation3 + $0x30] sm:$0xff] %vm896, %v894
        %904 = vst.msk [vmem:[#allocation3 + $0x38] sm:$0xff] %vm896, %v895
        %v905 = vld [vmem:[#allocation4] sm:$0xff]
        %v906 = vld [vmem:[#allocation4 + $0x8] sm:$0xff]
        %v907 = vld [vmem:[#allocation4 + $0x10] sm:$0xff]
        %v908 = vld [vmem:[#allocation4 + $0x18] sm:$0xff]
        %v909 = vld [vmem:[#allocation4 + $0x20] sm:$0xff]
        %v910 = vld [vmem:[#allocation4 + $0x28] sm:$0xff]
        %v911 = vld [vmem:[#allocation4 + $0x30] sm:$0xff]
        %v912 = vld [vmem:[#allocation4 + $0x38] sm:$0xff]
        %v913 = vmul.f32 %v769, %v905
        %v914 = vmul.f32 %v771, %v906
        %v915 = vmul.f32 %v773, %v907
        %v916 = vmul.f32 %v775, %v908
        %v917 = vmul.f32 %v777, %v909
        %v918 = vmul.f32 %v779, %v910
        %v919 = vmul.f32 %v781, %v911
        %v920 = vmul.f32 %v783, %v912
        %v921 = vmul.f32 %v848, %v593
        %v922 = vmul.f32 %v849, %v600
        %v923 = vmul.f32 %v850, %v607
        %v924 = vmul.f32 %v851, %v614
        %v925 = vmul.f32 %v852, %v621
        %v926 = vmul.f32 %v853, %v628
        %v927 = vmul.f32 %v854, %v635
        %v928 = vmul.f32 %v855, %v642
        %929 = vadd.xlane.f32.xlu0 %v921
        %v930 = vpop.xlane.xlu0 %929
        %931 = vadd.xlane.f32.xlu0 %v922
        %v932 = vpop.xlane.xlu0 %931
        %933 = vadd.xlane.f32.xlu0 %v923
        %v934 = vpop.xlane.xlu0 %933
        %935 = vadd.xlane.f32.xlu0 %v924
        %v936 = vpop.xlane.xlu0 %935
        %937 = vadd.xlane.f32.xlu0 %v925
        %v938 = vpop.xlane.xlu0 %937
        %939 = vadd.xlane.f32.xlu0 %v926
        %v940 = vpop.xlane.xlu0 %939
        %941 = vadd.xlane.f32.xlu0 %v927
        %v942 = vpop.xlane.xlu0 %941
        %943 = vadd.xlane.f32.xlu0 %v928
        %v944 = vpop.xlane.xlu0 %943
        %v945 = vadd.f32 %v913, %v930
        %v946 = vadd.f32 %v914, %v932
        %v947 = vadd.f32 %v915, %v934
        %v948 = vadd.f32 %v916, %v936
        %v949 = vadd.f32 %v917, %v938
        %v950 = vadd.f32 %v918, %v940
        %v951 = vadd.f32 %v919, %v942
        %v952 = vadd.f32 %v920, %v944
        %953 = vst.msk [vmem:[#allocation4] sm:$0xff] %vm896, %v945
        %954 = vst.msk [vmem:[#allocation4 + $0x8] sm:$0xff] %vm896, %v946
        %955 = vst.msk [vmem:[#allocation4 + $0x10] sm:$0xff] %vm896, %v947
        %956 = vst.msk [vmem:[#allocation4 + $0x18] sm:$0xff] %vm896, %v948
        %957 = vst.msk [vmem:[#allocation4 + $0x20] sm:$0xff] %vm896, %v949
        %958 = vst.msk [vmem:[#allocation4 + $0x28] sm:$0xff] %vm896, %v950
        %959 = vst.msk [vmem:[#allocation4 + $0x30] sm:$0xff] %vm896, %v951
        %960 = vst.msk [vmem:[#allocation4 + $0x38] sm:$0xff] %vm896, %v952
        %961 = vst.msk [vmem:[#allocation2] sm:$0xff] %vm896, %v752
        %962 = vst.msk [vmem:[#allocation2 + $0x8] sm:$0xff] %vm896, %v753
        %963 = vst.msk [vmem:[#allocation2 + $0x10] sm:$0xff] %vm896, %v754
        %964 = vst.msk [vmem:[#allocation2 + $0x18] sm:$0xff] %vm896, %v755
        %965 = vst.msk [vmem:[#allocation2 + $0x20] sm:$0xff] %vm896, %v756
        %966 = vst.msk [vmem:[#allocation2 + $0x28] sm:$0xff] %vm896, %v757
        %967 = vst.msk [vmem:[#allocation2 + $0x30] sm:$0xff] %vm896, %v758
        %968 = vst.msk [vmem:[#allocation2 + $0x38] sm:$0xff] %vm896, %v759
        %v969 = vld [vmem:[#allocation5] sm:$0xff]
        %v970 = vld [vmem:[#allocation5 + $0x8] sm:$0xff]
        %v971 = vld [vmem:[#allocation5 + $0x10] sm:$0xff]
        %v972 = vld [vmem:[#allocation5 + $0x18] sm:$0xff]
        %v973 = vld [vmem:[#allocation5 + $0x20] sm:$0xff]
        %v974 = vld [vmem:[#allocation5 + $0x28] sm:$0xff]
        %v975 = vld [vmem:[#allocation5 + $0x30] sm:$0xff]
        %v976 = vld [vmem:[#allocation5 + $0x38] sm:$0xff]
        %v977 = vsub.f32 0.0, %v593
        %v978 = vsub.f32 0.0, %v600
        %v979 = vsub.f32 0.0, %v607
        %v980 = vsub.f32 0.0, %v614
        %v981 = vsub.f32 0.0, %v621
        %v982 = vsub.f32 0.0, %v628
        %v983 = vsub.f32 0.0, %v635
        %v984 = vsub.f32 0.0, %v642
        %v985 = vsel %vm712, %v977, -1e+30
        %v986 = vsel %vm713, %v978, -1e+30
        %v987 = vsel %vm714, %v979, -1e+30
        %v988 = vsel %vm715, %v980, -1e+30
        %v989 = vsel %vm716, %v981, -1e+30
        %v990 = vsel %vm717, %v982, -1e+30
        %v991 = vsel %vm718, %v983, -1e+30
        %v992 = vsel %vm719, %v984, -1e+30
        %993 = vmax.xlane.f32.xlu0 %v985
        %v994 = vpop.xlane.xlu0 %993
        %995 = vmax.xlane.f32.xlu0 %v986
        %v996 = vpop.xlane.xlu0 %995
        %997 = vmax.xlane.f32.xlu0 %v987
        %v998 = vpop.xlane.xlu0 %997
        %999 = vmax.xlane.f32.xlu0 %v988
        %v1000 = vpop.xlane.xlu0 %999
        %1001 = vmax.xlane.f32.xlu0 %v989
        %v1002 = vpop.xlane.xlu0 %1001
        %1003 = vmax.xlane.f32.xlu0 %v990
        %v1004 = vpop.xlane.xlu0 %1003
        %1005 = vmax.xlane.f32.xlu0 %v991
        %v1006 = vpop.xlane.xlu0 %1005
        %1007 = vmax.xlane.f32.xlu0 %v992
        %v1008 = vpop.xlane.xlu0 %1007
        %v1009 = vmax.f32 %v969, %v994
        %v1010 = vmax.f32 %v970, %v996
        %v1011 = vmax.f32 %v971, %v998
        %v1012 = vmax.f32 %v972, %v1000
        %v1013 = vmax.f32 %v973, %v1002
        %v1014 = vmax.f32 %v974, %v1004
        %v1015 = vmax.f32 %v975, %v1006
        %v1016 = vmax.f32 %v976, %v1008
        %v1017 = vsub.f32 %v969, %v1009
        %v1018 = vsub.f32 %v970, %v1010
        %v1019 = vsub.f32 %v971, %v1011
        %v1020 = vsub.f32 %v972, %v1012
        %v1021 = vsub.f32 %v973, %v1013
        %v1022 = vsub.f32 %v974, %v1014
        %v1023 = vsub.f32 %v975, %v1015
        %v1024 = vsub.f32 %v976, %v1016
        %v1025 = vmul.f32 %v1017, 1.442695
        %v1026 = vpow.pop %v1025
        %v1027 = vmul.f32 %v1018, 1.442695
        %v1028 = vpow.pop %v1027
        %v1029 = vmul.f32 %v1019, 1.442695
        %v1030 = vpow.pop %v1029
        %v1031 = vmul.f32 %v1020, 1.442695
        %v1032 = vpow.pop %v1031
        %v1033 = vmul.f32 %v1021, 1.442695
        %v1034 = vpow.pop %v1033
        %v1035 = vmul.f32 %v1022, 1.442695
        %v1036 = vpow.pop %v1035
        %v1037 = vmul.f32 %v1023, 1.442695
        %v1038 = vpow.pop %v1037
        %v1039 = vmul.f32 %v1024, 1.442695
        %v1040 = vpow.pop %v1039
        %1042 = vset.pattern.permute.xlu0 0
        %1043 = vperm.xlu0 %1042, %v1009
        %v1044 = vpop.permute.xlu0 %1043
        %1047 = vset.pattern.permute.xlu0 0
        %1048 = vperm.xlu0 %1047, %v1010
        %v1049 = vpop.permute.xlu0 %1048
        %1052 = vset.pattern.permute.xlu0 0
        %1053 = vperm.xlu0 %1052, %v1011
        %v1054 = vpop.permute.xlu0 %1053
        %1057 = vset.pattern.permute.xlu0 0
        %1058 = vperm.xlu0 %1057, %v1012
        %v1059 = vpop.permute.xlu0 %1058
        %1062 = vset.pattern.permute.xlu0 0
        %1063 = vperm.xlu0 %1062, %v1013
        %v1064 = vpop.permute.xlu0 %1063
        %1067 = vset.pattern.permute.xlu0 0
        %1068 = vperm.xlu0 %1067, %v1014
        %v1069 = vpop.permute.xlu0 %1068
        %1072 = vset.pattern.permute.xlu0 0
        %1073 = vperm.xlu0 %1072, %v1015
        %v1074 = vpop.permute.xlu0 %1073
        %1077 = vset.pattern.permute.xlu0 0
        %1078 = vperm.xlu0 %1077, %v1016
        %v1079 = vpop.permute.xlu0 %1078
        %v1081 = vsub.f32 %v977, %v1044
        %v1082 = vsub.f32 %v978, %v1049
        %v1083 = vsub.f32 %v979, %v1054
        %v1084 = vsub.f32 %v980, %v1059
        %v1085 = vsub.f32 %v981, %v1064
        %v1086 = vsub.f32 %v982, %v1069
        %v1087 = vsub.f32 %v983, %v1074
        %v1088 = vsub.f32 %v984, %v1079
        %v1089 = vmul.f32 %v1081, 1.442695
        %v1090 = vpow.pop %v1089
        %v1091 = vmul.f32 %v1082, 1.442695
        %v1092 = vpow.pop %v1091
        %v1093 = vmul.f32 %v1083, 1.442695
        %v1094 = vpow.pop %v1093
        %v1095 = vmul.f32 %v1084, 1.442695
        %v1096 = vpow.pop %v1095
        %v1097 = vmul.f32 %v1085, 1.442695
        %v1098 = vpow.pop %v1097
        %v1099 = vmul.f32 %v1086, 1.442695
        %v1100 = vpow.pop %v1099
        %v1101 = vmul.f32 %v1087, 1.442695
        %v1102 = vpow.pop %v1101
        %v1103 = vmul.f32 %v1088, 1.442695
        %v1104 = vpow.pop %v1103
        %v1105 = vsel %vm712, %v1090, 0.0
        %v1106 = vsel %vm713, %v1092, 0.0
        %v1107 = vsel %vm714, %v1094, 0.0
        %v1108 = vsel %vm715, %v1096, 0.0
        %v1109 = vsel %vm716, %v1098, 0.0
        %v1110 = vsel %vm717, %v1100, 0.0
        %v1111 = vsel %vm718, %v1102, 0.0
        %v1112 = vsel %vm719, %v1104, 0.0
        %v1113 = vld [vmem:[#allocation6] sm:$0xff]
        %v1114 = vld [vmem:[#allocation6 + $0x8] sm:$0xff]
        %v1115 = vld [vmem:[#allocation6 + $0x10] sm:$0xff]
        %v1116 = vld [vmem:[#allocation6 + $0x18] sm:$0xff]
        %v1117 = vld [vmem:[#allocation6 + $0x20] sm:$0xff]
        %v1118 = vld [vmem:[#allocation6 + $0x28] sm:$0xff]
        %v1119 = vld [vmem:[#allocation6 + $0x30] sm:$0xff]
        %v1120 = vld [vmem:[#allocation6 + $0x38] sm:$0xff]
        %v1121 = vmul.f32 %v1026, %v1113
        %v1122 = vmul.f32 %v1028, %v1114
        %v1123 = vmul.f32 %v1030, %v1115
        %v1124 = vmul.f32 %v1032, %v1116
        %v1125 = vmul.f32 %v1034, %v1117
        %v1126 = vmul.f32 %v1036, %v1118
        %v1127 = vmul.f32 %v1038, %v1119
        %v1128 = vmul.f32 %v1040, %v1120
        %1129 = vadd.xlane.f32.xlu0 %v1105
        %v1130 = vpop.xlane.xlu0 %1129
        %1131 = vadd.xlane.f32.xlu0 %v1106
        %v1132 = vpop.xlane.xlu0 %1131
        %1133 = vadd.xlane.f32.xlu0 %v1107
        %v1134 = vpop.xlane.xlu0 %1133
        %1135 = vadd.xlane.f32.xlu0 %v1108
        %v1136 = vpop.xlane.xlu0 %1135
        %1137 = vadd.xlane.f32.xlu0 %v1109
        %v1138 = vpop.xlane.xlu0 %1137
        %1139 = vadd.xlane.f32.xlu0 %v1110
        %v1140 = vpop.xlane.xlu0 %1139
        %1141 = vadd.xlane.f32.xlu0 %v1111
        %v1142 = vpop.xlane.xlu0 %1141
        %1143 = vadd.xlane.f32.xlu0 %v1112
        %v1144 = vpop.xlane.xlu0 %1143
        %v1145 = vadd.f32 %v1121, %v1130
        %v1146 = vadd.f32 %v1122, %v1132
        %v1147 = vadd.f32 %v1123, %v1134
        %v1148 = vadd.f32 %v1124, %v1136
        %v1149 = vadd.f32 %v1125, %v1138
        %v1150 = vadd.f32 %v1126, %v1140
        %v1151 = vadd.f32 %v1127, %v1142
        %v1152 = vadd.f32 %v1128, %v1144
        %1153 = vst.msk [vmem:[#allocation6] sm:$0xff] %vm896, %v1145
        %1154 = vst.msk [vmem:[#allocation6 + $0x8] sm:$0xff] %vm896, %v1146
        %1155 = vst.msk [vmem:[#allocation6 + $0x10] sm:$0xff] %vm896, %v1147
        %1156 = vst.msk [vmem:[#allocation6 + $0x18] sm:$0xff] %vm896, %v1148
        %1157 = vst.msk [vmem:[#allocation6 + $0x20] sm:$0xff] %vm896, %v1149
        %1158 = vst.msk [vmem:[#allocation6 + $0x28] sm:$0xff] %vm896, %v1150
        %1159 = vst.msk [vmem:[#allocation6 + $0x30] sm:$0xff] %vm896, %v1151
        %1160 = vst.msk [vmem:[#allocation6 + $0x38] sm:$0xff] %vm896, %v1152
        %v1161 = vld [vmem:[#allocation7] sm:$0xff]
        %v1162 = vld [vmem:[#allocation7 + $0x8] sm:$0xff]
        %v1163 = vld [vmem:[#allocation7 + $0x10] sm:$0xff]
        %v1164 = vld [vmem:[#allocation7 + $0x18] sm:$0xff]
        %v1165 = vld [vmem:[#allocation7 + $0x20] sm:$0xff]
        %v1166 = vld [vmem:[#allocation7 + $0x28] sm:$0xff]
        %v1167 = vld [vmem:[#allocation7 + $0x30] sm:$0xff]
        %v1168 = vld [vmem:[#allocation7 + $0x38] sm:$0xff]
        %v1169 = vmul.f32 %v1026, %v1161
        %v1170 = vmul.f32 %v1028, %v1162
        %v1171 = vmul.f32 %v1030, %v1163
        %v1172 = vmul.f32 %v1032, %v1164
        %v1173 = vmul.f32 %v1034, %v1165
        %v1174 = vmul.f32 %v1036, %v1166
        %v1175 = vmul.f32 %v1038, %v1167
        %v1176 = vmul.f32 %v1040, %v1168
        %v1177 = vmul.f32 %v1105, %v593
        %v1178 = vmul.f32 %v1106, %v600
        %v1179 = vmul.f32 %v1107, %v607
        %v1180 = vmul.f32 %v1108, %v614
        %v1181 = vmul.f32 %v1109, %v621
        %v1182 = vmul.f32 %v1110, %v628
        %v1183 = vmul.f32 %v1111, %v635
        %v1184 = vmul.f32 %v1112, %v642
        %1185 = vadd.xlane.f32.xlu0 %v1177
        %v1186 = vpop.xlane.xlu0 %1185
        %1187 = vadd.xlane.f32.xlu0 %v1178
        %v1188 = vpop.xlane.xlu0 %1187
        %1189 = vadd.xlane.f32.xlu0 %v1179
        %v1190 = vpop.xlane.xlu0 %1189
        %1191 = vadd.xlane.f32.xlu0 %v1180
        %v1192 = vpop.xlane.xlu0 %1191
        %1193 = vadd.xlane.f32.xlu0 %v1181
        %v1194 = vpop.xlane.xlu0 %1193
        %1195 = vadd.xlane.f32.xlu0 %v1182
        %v1196 = vpop.xlane.xlu0 %1195
        %1197 = vadd.xlane.f32.xlu0 %v1183
        %v1198 = vpop.xlane.xlu0 %1197
        %1199 = vadd.xlane.f32.xlu0 %v1184
        %v1200 = vpop.xlane.xlu0 %1199
        %v1201 = vadd.f32 %v1169, %v1186
        %v1202 = vadd.f32 %v1170, %v1188
        %v1203 = vadd.f32 %v1171, %v1190
        %v1204 = vadd.f32 %v1172, %v1192
        %v1205 = vadd.f32 %v1173, %v1194
        %v1206 = vadd.f32 %v1174, %v1196
        %v1207 = vadd.f32 %v1175, %v1198
        %v1208 = vadd.f32 %v1176, %v1200
        %1209 = vst.msk [vmem:[#allocation7] sm:$0xff] %vm896, %v1201
        %1210 = vst.msk [vmem:[#allocation7 + $0x8] sm:$0xff] %vm896, %v1202
        %1211 = vst.msk [vmem:[#allocation7 + $0x10] sm:$0xff] %vm896, %v1203
        %1212 = vst.msk [vmem:[#allocation7 + $0x18] sm:$0xff] %vm896, %v1204
        %1213 = vst.msk [vmem:[#allocation7 + $0x20] sm:$0xff] %vm896, %v1205
        %1214 = vst.msk [vmem:[#allocation7 + $0x28] sm:$0xff] %vm896, %v1206
        %1215 = vst.msk [vmem:[#allocation7 + $0x30] sm:$0xff] %vm896, %v1207
        %1216 = vst.msk [vmem:[#allocation7 + $0x38] sm:$0xff] %vm896, %v1208
        %1217 = vst.msk [vmem:[#allocation5] sm:$0xff] %vm896, %v1009
        %1218 = vst.msk [vmem:[#allocation5 + $0x8] sm:$0xff] %vm896, %v1010
        %1219 = vst.msk [vmem:[#allocation5 + $0x10] sm:$0xff] %vm896, %v1011
        %1220 = vst.msk [vmem:[#allocation5 + $0x18] sm:$0xff] %vm896, %v1012
        %1221 = vst.msk [vmem:[#allocation5 + $0x20] sm:$0xff] %vm896, %v1013
        %1222 = vst.msk [vmem:[#allocation5 + $0x28] sm:$0xff] %vm896, %v1014
        %1223 = vst.msk [vmem:[#allocation5 + $0x30] sm:$0xff] %vm896, %v1015
        %1224 = vst.msk [vmem:[#allocation5 + $0x38] sm:$0xff] %vm896, %v1016
        %p1225 = scmp.eq.s32.totalorder %s20, 1
        // Predicated region
        $region79: #{tpu_custom_call.1} parent=69 // pred_check
          %p1226 = pneg %p1225
        $region80: #{tpu_custom_call.1} parent=69 // pred_check_branch
          %1228 = sbr.rel (%p1226) target = $region82
        $region81: #{tpu_custom_call.1} parent=69 // pred_region
          %v1229 = vld [vmem:[#allocation4] sm:$0xff]
          %v1230 = vld [vmem:[#allocation4 + $0x8] sm:$0xff]
          %v1231 = vld [vmem:[#allocation4 + $0x10] sm:$0xff]
          %v1232 = vld [vmem:[#allocation4 + $0x18] sm:$0xff]
          %v1233 = vld [vmem:[#allocation4 + $0x20] sm:$0xff]
          %v1234 = vld [vmem:[#allocation4 + $0x28] sm:$0xff]
          %v1235 = vld [vmem:[#allocation4 + $0x30] sm:$0xff]
          %v1236 = vld [vmem:[#allocation4 + $0x38] sm:$0xff]
          %v1237 = vld [vmem:[#allocation3] sm:$0xff]
          %v1238 = vld [vmem:[#allocation3 + $0x8] sm:$0xff]
          %v1239 = vld [vmem:[#allocation3 + $0x10] sm:$0xff]
          %v1240 = vld [vmem:[#allocation3 + $0x18] sm:$0xff]
          %v1241 = vld [vmem:[#allocation3 + $0x20] sm:$0xff]
          %v1242 = vld [vmem:[#allocation3 + $0x28] sm:$0xff]
          %v1243 = vld [vmem:[#allocation3 + $0x30] sm:$0xff]
          %v1244 = vld [vmem:[#allocation3 + $0x38] sm:$0xff]
          %v1245 = vld [vmem:[#allocation2] sm:$0xff]
          %v1246 = vld [vmem:[#allocation2 + $0x8] sm:$0xff]
          %v1247 = vld [vmem:[#allocation2 + $0x10] sm:$0xff]
          %v1248 = vld [vmem:[#allocation2 + $0x18] sm:$0xff]
          %v1249 = vld [vmem:[#allocation2 + $0x20] sm:$0xff]
          %v1250 = vld [vmem:[#allocation2 + $0x28] sm:$0xff]
          %v1251 = vld [vmem:[#allocation2 + $0x30] sm:$0xff]
          %v1252 = vld [vmem:[#allocation2 + $0x38] sm:$0xff]
          %v1253 = vsub.f32 0.0, %v1245
          %v1254 = vsub.f32 0.0, %v1246
          %v1255 = vsub.f32 0.0, %v1247
          %v1256 = vsub.f32 0.0, %v1248
          %v1257 = vsub.f32 0.0, %v1249
          %v1258 = vsub.f32 0.0, %v1250
          %v1259 = vsub.f32 0.0, %v1251
          %v1260 = vsub.f32 0.0, %v1252
          %v1261 = vmul.f32 %v1253, 1.442695
          %v1262 = vpow.pop %v1261
          %v1263 = vmul.f32 %v1254, 1.442695
          %v1264 = vpow.pop %v1263
          %v1265 = vmul.f32 %v1255, 1.442695
          %v1266 = vpow.pop %v1265
          %v1267 = vmul.f32 %v1256, 1.442695
          %v1268 = vpow.pop %v1267
          %v1269 = vmul.f32 %v1257, 1.442695
          %v1270 = vpow.pop %v1269
          %v1271 = vmul.f32 %v1258, 1.442695
          %v1272 = vpow.pop %v1271
          %v1273 = vmul.f32 %v1259, 1.442695
          %v1274 = vpow.pop %v1273
          %v1275 = vmul.f32 %v1260, 1.442695
          %v1276 = vpow.pop %v1275
          %v1277 = vmul.f32 %v1262, 1e-12
          %v1278 = vmul.f32 %v1264, 1e-12
          %v1279 = vmul.f32 %v1266, 1e-12
          %v1280 = vmul.f32 %v1268, 1e-12
          %v1281 = vmul.f32 %v1270, 1e-12
          %v1282 = vmul.f32 %v1272, 1e-12
          %v1283 = vmul.f32 %v1274, 1e-12
          %v1284 = vmul.f32 %v1276, 1e-12
          %v1285 = vadd.f32 %v1237, %v1277
          %v1286 = vadd.f32 %v1238, %v1278
          %v1287 = vadd.f32 %v1239, %v1279
          %v1288 = vadd.f32 %v1240, %v1280
          %v1289 = vadd.f32 %v1241, %v1281
          %v1290 = vadd.f32 %v1242, %v1282
          %v1291 = vadd.f32 %v1243, %v1283
          %v1292 = vadd.f32 %v1244, %v1284
          %v1293 = vrcp.pop %v1285
          %v1294 = vmul.f32 %v1229, %v1293
          %v1295 = vrcp.pop %v1286
          %v1296 = vmul.f32 %v1230, %v1295
          %v1297 = vrcp.pop %v1287
          %v1298 = vmul.f32 %v1231, %v1297
          %v1299 = vrcp.pop %v1288
          %v1300 = vmul.f32 %v1232, %v1299
          %v1301 = vrcp.pop %v1289
          %v1302 = vmul.f32 %v1233, %v1301
          %v1303 = vrcp.pop %v1290
          %v1304 = vmul.f32 %v1234, %v1303
          %v1305 = vrcp.pop %v1291
          %v1306 = vmul.f32 %v1235, %v1305
          %v1307 = vrcp.pop %v1292
          %v1308 = vmul.f32 %v1236, %v1307
          %v1309 = vld [vmem:[#allocation7] sm:$0xff]
          %v1310 = vld [vmem:[#allocation7 + $0x8] sm:$0xff]
          %v1311 = vld [vmem:[#allocation7 + $0x10] sm:$0xff]
          %v1312 = vld [vmem:[#allocation7 + $0x18] sm:$0xff]
          %v1313 = vld [vmem:[#allocation7 + $0x20] sm:$0xff]
          %v1314 = vld [vmem:[#allocation7 + $0x28] sm:$0xff]
          %v1315 = vld [vmem:[#allocation7 + $0x30] sm:$0xff]
          %v1316 = vld [vmem:[#allocation7 + $0x38] sm:$0xff]
          %v1317 = vld [vmem:[#allocation6] sm:$0xff]
          %v1318 = vld [vmem:[#allocation6 + $0x8] sm:$0xff]
          %v1319 = vld [vmem:[#allocation6 + $0x10] sm:$0xff]
          %v1320 = vld [vmem:[#allocation6 + $0x18] sm:$0xff]
          %v1321 = vld [vmem:[#allocation6 + $0x20] sm:$0xff]
          %v1322 = vld [vmem:[#allocation6 + $0x28] sm:$0xff]
          %v1323 = vld [vmem:[#allocation6 + $0x30] sm:$0xff]
          %v1324 = vld [vmem:[#allocation6 + $0x38] sm:$0xff]
          %v1325 = vld [vmem:[#allocation5] sm:$0xff]
          %v1326 = vld [vmem:[#allocation5 + $0x8] sm:$0xff]
          %v1327 = vld [vmem:[#allocation5 + $0x10] sm:$0xff]
          %v1328 = vld [vmem:[#allocation5 + $0x18] sm:$0xff]
          %v1329 = vld [vmem:[#allocation5 + $0x20] sm:$0xff]
          %v1330 = vld [vmem:[#allocation5 + $0x28] sm:$0xff]
          %v1331 = vld [vmem:[#allocation5 + $0x30] sm:$0xff]
          %v1332 = vld [vmem:[#allocation5 + $0x38] sm:$0xff]
          %v1333 = vsub.f32 0.0, %v1325
          %v1334 = vsub.f32 0.0, %v1326
          %v1335 = vsub.f32 0.0, %v1327
          %v1336 = vsub.f32 0.0, %v1328
          %v1337 = vsub.f32 0.0, %v1329
          %v1338 = vsub.f32 0.0, %v1330
          %v1339 = vsub.f32 0.0, %v1331
          %v1340 = vsub.f32 0.0, %v1332
          %v1341 = vmul.f32 %v1333, 1.442695
          %v1342 = vpow.pop %v1341
          %v1343 = vmul.f32 %v1334, 1.442695
          %v1344 = vpow.pop %v1343
          %v1345 = vmul.f32 %v1335, 1.442695
          %v1346 = vpow.pop %v1345
          %v1347 = vmul.f32 %v1336, 1.442695
          %v1348 = vpow.pop %v1347
          %v1349 = vmul.f32 %v1337, 1.442695
          %v1350 = vpow.pop %v1349
          %v1351 = vmul.f32 %v1338, 1.442695
          %v1352 = vpow.pop %v1351
          %v1353 = vmul.f32 %v1339, 1.442695
          %v1354 = vpow.pop %v1353
          %v1355 = vmul.f32 %v1340, 1.442695
          %v1356 = vpow.pop %v1355
          %v1357 = vmul.f32 %v1342, 1e-12
          %v1358 = vmul.f32 %v1344, 1e-12
          %v1359 = vmul.f32 %v1346, 1e-12
          %v1360 = vmul.f32 %v1348, 1e-12
          %v1361 = vmul.f32 %v1350, 1e-12
          %v1362 = vmul.f32 %v1352, 1e-12
          %v1363 = vmul.f32 %v1354, 1e-12
          %v1364 = vmul.f32 %v1356, 1e-12
          %v1365 = vadd.f32 %v1317, %v1357
          %v1366 = vadd.f32 %v1318, %v1358
          %v1367 = vadd.f32 %v1319, %v1359
          %v1368 = vadd.f32 %v1320, %v1360
          %v1369 = vadd.f32 %v1321, %v1361
          %v1370 = vadd.f32 %v1322, %v1362
          %v1371 = vadd.f32 %v1323, %v1363
          %v1372 = vadd.f32 %v1324, %v1364
          %v1373 = vrcp.pop %v1365
          %v1374 = vmul.f32 %v1309, %v1373
          %v1375 = vrcp.pop %v1366
          %v1376 = vmul.f32 %v1310, %v1375
          %v1377 = vrcp.pop %v1367
          %v1378 = vmul.f32 %v1311, %v1377
          %v1379 = vrcp.pop %v1368
          %v1380 = vmul.f32 %v1312, %v1379
          %v1381 = vrcp.pop %v1369
          %v1382 = vmul.f32 %v1313, %v1381
          %v1383 = vrcp.pop %v1370
          %v1384 = vmul.f32 %v1314, %v1383
          %v1385 = vrcp.pop %v1371
          %v1386 = vmul.f32 %v1315, %v1385
          %v1387 = vrcp.pop %v1372
          %v1388 = vmul.f32 %v1316, %v1387
          %v1389 = vsub.f32 %v1294, %v1374
          %v1390 = vsub.f32 %v1296, %v1376
          %v1391 = vsub.f32 %v1298, %v1378
          %v1392 = vsub.f32 %v1300, %v1380
          %v1393 = vsub.f32 %v1302, %v1382
          %v1394 = vsub.f32 %v1304, %v1384
          %v1395 = vsub.f32 %v1306, %v1386
          %v1396 = vsub.f32 %v1308, %v1388
          %v1397 = vmax.f32 %v1389, 0.0
          %v1398 = vmax.f32 %v1390, 0.0
          %v1399 = vmax.f32 %v1391, 0.0
          %v1400 = vmax.f32 %v1392, 0.0
          %v1401 = vmax.f32 %v1393, 0.0
          %v1402 = vmax.f32 %v1394, 0.0
          %v1403 = vmax.f32 %v1395, 0.0
          %v1404 = vmax.f32 %v1396, 0.0
          %v1405 = vand.u32 2147483647, %v1389
          %v1406 = vand.u32 2147483647, %v1390
          %v1407 = vand.u32 2147483647, %v1391
          %v1408 = vand.u32 2147483647, %v1392
          %v1409 = vand.u32 2147483647, %v1393
          %v1410 = vand.u32 2147483647, %v1394
          %v1411 = vand.u32 2147483647, %v1395
          %v1412 = vand.u32 2147483647, %v1396
          %v1413 = vsub.f32 0.0, %v1405
          %v1414 = vsub.f32 0.0, %v1406
          %v1415 = vsub.f32 0.0, %v1407
          %v1416 = vsub.f32 0.0, %v1408
          %v1417 = vsub.f32 0.0, %v1409
          %v1418 = vsub.f32 0.0, %v1410
          %v1419 = vsub.f32 0.0, %v1411
          %v1420 = vsub.f32 0.0, %v1412
          %v1421 = vmul.f32 %v1413, 1.442695
          %v1422 = vpow.pop %v1421
          %v1423 = vmul.f32 %v1414, 1.442695
          %v1424 = vpow.pop %v1423
          %v1425 = vmul.f32 %v1415, 1.442695
          %v1426 = vpow.pop %v1425
          %v1427 = vmul.f32 %v1416, 1.442695
          %v1428 = vpow.pop %v1427
          %v1429 = vmul.f32 %v1417, 1.442695
          %v1430 = vpow.pop %v1429
          %v1431 = vmul.f32 %v1418, 1.442695
          %v1432 = vpow.pop %v1431
          %v1433 = vmul.f32 %v1419, 1.442695
          %v1434 = vpow.pop %v1433
          %v1435 = vmul.f32 %v1420, 1.442695
          %v1436 = vpow.pop %v1435
          %v1437 = vadd.f32 %v1422, 1.0
          %v1438 = vadd.f32 %v1424, 1.0
          %v1439 = vadd.f32 %v1426, 1.0
          %v1440 = vadd.f32 %v1428, 1.0
          %v1441 = vadd.f32 %v1430, 1.0
          %v1442 = vadd.f32 %v1432, 1.0
          %v1443 = vadd.f32 %v1434, 1.0
          %v1444 = vadd.f32 %v1436, 1.0
          %v1445 = vlog2.pop %v1437
          %v1446 = vmul.f32 %v1445, 0.6931472
          %v1447 = vlog2.pop %v1438
          %v1448 = vmul.f32 %v1447, 0.6931472
          %v1449 = vlog2.pop %v1439
          %v1450 = vmul.f32 %v1449, 0.6931472
          %v1451 = vlog2.pop %v1440
          %v1452 = vmul.f32 %v1451, 0.6931472
          %v1453 = vlog2.pop %v1441
          %v1454 = vmul.f32 %v1453, 0.6931472
          %v1455 = vlog2.pop %v1442
          %v1456 = vmul.f32 %v1455, 0.6931472
          %v1457 = vlog2.pop %v1443
          %v1458 = vmul.f32 %v1457, 0.6931472
          %v1459 = vlog2.pop %v1444
          %v1460 = vmul.f32 %v1459, 0.6931472
          %v1461 = vadd.f32 %v1397, %v1446
          %v1462 = vadd.f32 %v1398, %v1448
          %v1463 = vadd.f32 %v1399, %v1450
          %v1464 = vadd.f32 %v1400, %v1452
          %v1465 = vadd.f32 %v1401, %v1454
          %v1466 = vadd.f32 %v1402, %v1456
          %v1467 = vadd.f32 %v1403, %v1458
          %v1468 = vadd.f32 %v1404, %v1460
          %1469 = vst.msk [vmem:[%s313] sm:$0xff] %vm896, %v1461
          %1470 = vst.msk [vmem:[%s313 + $0x8] sm:$0xff] %vm896, %v1462
          %1471 = vst.msk [vmem:[%s313 + $0x10] sm:$0xff] %vm896, %v1463
          %1472 = vst.msk [vmem:[%s313 + $0x18] sm:$0xff] %vm896, %v1464
          %1473 = vst.msk [vmem:[%s313 + $0x20] sm:$0xff] %vm896, %v1465
          %1474 = vst.msk [vmem:[%s313 + $0x28] sm:$0xff] %vm896, %v1466
          %1475 = vst.msk [vmem:[%s313 + $0x30] sm:$0xff] %vm896, %v1467
          %1476 = vst.msk [vmem:[%s313 + $0x38] sm:$0xff] %vm896, %v1468
        $region82: #{tpu_custom_call.1} parent=69 // pred_fallthru
          _
        %s1477 = smul.u32 8, %s19
        %p1478 = scmp.lt.s32.totalorder %s1477, 31
        %s1479 = scalar_select %p1478, %s1477, 31
        %s1480 = smul.addr %s1479, 8
        %s1481 = scalar_lea.vmem %s4, %s1480
        // Predicated region
        $region83: #{tpu_custom_call.1} parent=69 // pred_check
          %p1482 = pneg %p149
        $region84: #{tpu_custom_call.1} parent=69 // pred_check_branch
          %1484 = sbr.rel (%p1482) target = $region86
        $region85: #{tpu_custom_call.1} parent=69 // pred_region
          %s1485 = smul.u32 8, %s19
        $region86: #{tpu_custom_call.1} parent=69 // pred_fallthru
          _
      $region70: #{tpu_custom_call.1} parent=5 // pred_fallthru
        _
      %p1486 = scmp.le.s32.totalorder 2, %s10
      // Predicated region
      $region87: #{tpu_custom_call.1} parent=5 // pred_check
        %p1487 = pneg %p1486
      $region88: #{tpu_custom_call.1} parent=5 // pred_check_branch
        %1489 = sbr.rel (%p1487) target = $region90
      $region89: #{tpu_custom_call.1} parent=5 // pred_region
        %s1490 = ssub.s32 %s10, 2
        // Predicated region
        $region91: #{tpu_custom_call.1} parent=89 // pred_check
          %p1491 = pneg %p155
        $region92: #{tpu_custom_call.1} parent=89 // pred_check_branch
          %1493 = sbr.rel (%p1491) target = $region94
        $region93: #{tpu_custom_call.1} parent=89 // pred_region
          %s1494 = smul.u32 8, %s21
          %p1495 = scmp.lt.s32.totalorder %s1494, 31
          %s1496 = scalar_select %p1495, %s1494, 31
          %s1497 = smul.addr %s1496, 8
          %s1498 = scalar_lea.vmem %s4, %s1497
        $region94: #{tpu_custom_call.1} parent=89 // pred_fallthru
          _
      $region90: #{tpu_custom_call.1} parent=5 // pred_fallthru
        _
    $region6: #{tpu_custom_call.1} parent=1 // loop_footer
      %s14 = sadd.s32 1, %s10
    $region7: #{tpu_custom_call.1} parent=1 // loop_footer_branch
      %9 = sbr.rel target = $region3
    $region8: #{tpu_custom_call.1} parent=1 // loop_exit
      _

</llo_original>
